<compile_context>
chip_gen: v6e
topology: v6e:2x2x1
jax: 0.10.0
libtpu: 0.0.40
codegen_flags: <defaults>
</compile_context>

<pallas_src>
import numpy as np
import jax
import jax.numpy as jnp
from jax import lax
from jax.experimental import pallas as pl
from jax.experimental.pallas import tpu as pltpu

N_ATT = 5          # shifting-attention heads per modality (module hard-codes 5)
SPLIT = 150        # module hard-codes x[:, :150, :] / x[:, 150:, :]
_INV_GNORM = float(1.0 / np.sqrt(N_ATT))

_MAX_BLOCK_BATCH = 128          # cap sized for v7x's 64 MiB VMEM; v5e/v6e can pass ~256
_VMEM_BUDGET = 36 << 20         # working-set budget used to derive the batch block
_DEFAULT_VMEM_LIMIT = 52 << 20  # <= ~56 MiB so the same setting fits v7x; raise on v5e/v6e


def _round_up(a, m):
    return -(-a // m) * m


def _choose_block_batch(n, ltot, lv, f, nclass):
    """Samples per grid step from a conservative per-sample VMEM footprint."""
    fp = _round_up(f, 128)
    lvp = _round_up(lv, 128)
    lt8 = _round_up(ltot, 8)
    per_sample = 4 * (
        2 * lt8 * fp                      # double-buffered x input block
        + lt8 * fp                        # in-kernel xv / xf slices of the block
        + 2 * (8 * lvp + 128)             # double-buffered attention + probs outputs
        + 4 * 8 * lvp                     # scores / exp / softmax intermediates
        + (6 + 2 * nclass) * 8 * fp)      # head outputs + fused fc temporaries
    b = max(1, _VMEM_BUDGET // per_sample)
    b = min(b, _MAX_BLOCK_BATCH)
    b = min(b, max(1, -(-n // 4)))        # keep >= ~4 grid steps (2 per TC on v7x)
    return int(b)


def _sanitize_block(b, n):
    """probs block is 2-D (B, nclass): B must be a multiple of 8 or equal N."""
    b = max(1, int(b))
    if b >= n or n <= 8:
        return int(n)
    return max(8, (b // 8) * 8)


def _shifting_attention(x, Wb, w, b):
    """Batched ShiftingAttention branch.

    x: (B, L, F); Wb: (B, n, F) pre-broadcast conv weights; w, b: (1, n, 1) f32.
    Returns (o: (B, n, F) normalized head outputs, att: (B, n, L) f32 attention).
    """
    # Conv1d bias omitted: constant along L, cancels in the length-axis softmax.
    s = jnp.einsum('bnf,blf->bnl', Wb, x,
                   preferred_element_type=jnp.float32)                    # (B, n, L)
    m = jnp.max(s, axis=-1, keepdims=True)
    e = jnp.exp(s - m)
    att = e * pl.reciprocal(jnp.sum(e, axis=-1, keepdims=True), approx=True)
    out = jnp.einsum('bnl,blf->bnf', att.astype(x.dtype), x,
                     preferred_element_type=jnp.float32)                  # (B, n, F)
    o = out * w + b
    # No epsilon: an exactly-zero head output yields inf/nan, matching the reference.
    o = o * (lax.rsqrt(jnp.sum(o * o, axis=-1, keepdims=True)) * _INV_GNORM)
    return o, att


def _kernel(x_ref, Wv_ref, Wf_ref, sc_ref, fcwv_ref, fcwf_ref, fcb_ref,
            probs_ref, wts1_ref):
    lf = x_ref.shape[1] - SPLIT
    xv = x_ref[:, pl.ds(0, SPLIT), :]             # (B, Lv, F) sliced from the one x block
    xf = x_ref[:, pl.ds(SPLIT, lf), :]            # (B, Lf, F)
    sc = sc_ref[...]                              # (4, n, 1): wv, bv, wf, bf

    ov, attv = _shifting_attention(xv, Wv_ref[...], sc[0:1], sc[1:2])
    of, _attf = _shifting_attention(xf, Wf_ref[...], sc[2:3], sc[3:4])

    # TODO(synk): nn.Dropout(0.1) is identity at inference and is not modeled here.

    # fc: logits[b, k] = fcb[k] + sum_{n,f} ov[b,n,f]*fcwv[k,n,f]
    #                           + sum_{n,f} of[b,n,f]*fcwf[k,n,f]
    # nclass is tiny, so one fused broadcast-multiply + reduction per branch
    # (no per-class Python loop, no lane-sparse concatenate).
    fcwv = fcwv_ref[...]                          # (nclass, n, F)
    fcwf = fcwf_ref[...]                          # (nclass, n, F)
    lv = jnp.sum(jnp.sum(ov[:, None, :, :] * fcwv[None], axis=-1), axis=-1)   # (B, k)
    lfc = jnp.sum(jnp.sum(of[:, None, :, :] * fcwf[None], axis=-1), axis=-1)  # (B, k)
    logits = lv + lfc + fcb_ref[...]              # (B, nclass)

    lm = jnp.max(logits, axis=-1, keepdims=True)
    le = jnp.exp(logits - lm)
    probs_ref[...] = le / jnp.sum(le, axis=-1, keepdims=True)  # exact divide (tiny)
    wts1_ref[...] = attv                          # (B, n, Lv) f32


def prepare_params(params, feature_dim, nclass):
    """One-time preprocessing of the module-layout parameters for the kernel."""
    Wv, cv, wv, bv, Wf, cf, wf, bf, fcw, fcb = params
    del cv, cf  # Conv1d biases cancel inside the length-axis softmax.
    f32 = jnp.float32
    sc = jnp.stack([wv, bv, wf, bf]).reshape(4, N_ATT, 1).astype(f32)
    fcw_r = fcw.reshape(nclass, 2 * N_ATT, feature_dim).astype(f32)
    fcwv = fcw_r[:, :N_ATT, :]                    # multiplies video-branch heads
    fcwf = fcw_r[:, N_ATT:, :]                    # multiplies face-branch heads
    fcb2 = fcb.reshape(1, nclass).astype(f32)
    return (Wv.astype(f32), Wf.astype(f32), sc, fcwv, fcwf, fcb2)


def attention_clusters_multimodal(x, prepared, nclass, *, block_batch=None,
                                  vmem_limit_bytes=None, input_dtype=None):
    """x: (N, L_total, F) with L_total > 150.

    Returns (probs (N, nclass), weights1 (N, 5, 150)).
    input_dtype=jnp.bfloat16 enables the half-traffic streaming path (default f32).
    """
    N, Ltot, F = x.shape
    Lv = SPLIT
    Lf = Ltot - SPLIT
    assert Lf > 0, "module requires sequence length > 150"
    Wv, Wf, sc, fcwv, fcwf, fcb2 = prepared

    cand = block_batch if block_batch else _choose_block_batch(N, Ltot, Lv, F, nclass)
    B = _sanitize_block(cand, N)
    nb = pl.cdiv(N, B)

    dt = jnp.dtype(input_dtype) if input_dtype is not None else x.dtype
    xin = x.astype(dt)
    # Pre-broadcast the tiny conv weights once on the host (constant block in VMEM;
    # avoids a per-step broadcast_in_dim inside the kernel).
    Wv_b = jnp.broadcast_to(Wv.astype(dt)[None], (B, N_ATT, F))
    Wf_b = jnp.broadcast_to(Wf.astype(dt)[None], (B, N_ATT, F))

    in_specs = [
        pl.BlockSpec((B, Ltot, F), lambda i: (i, 0, 0)),        # one x block; no xv/xf copies
        pl.BlockSpec((B, N_ATT, F), lambda i: (0, 0, 0)),       # Wv (broadcast)
        pl.BlockSpec((B, N_ATT, F), lambda i: (0, 0, 0)),       # Wf (broadcast)
        pl.BlockSpec((4, N_ATT, 1), lambda i: (0, 0, 0)),       # per-head scalars
        pl.BlockSpec((nclass, N_ATT, F), lambda i: (0, 0, 0)),  # fc weights (video heads)
        pl.BlockSpec((nclass, N_ATT, F), lambda i: (0, 0, 0)),  # fc weights (face heads)
        pl.BlockSpec((1, nclass), lambda i: (0, 0)),            # fc bias
    ]
    out_specs = [
        pl.BlockSpec((B, nclass), lambda i: (i, 0)),            # 2-D, sublane-dense probs
        pl.BlockSpec((B, N_ATT, Lv), lambda i: (i, 0, 0)),      # attention weights (video)
    ]
    out_shape = [
        jax.ShapeDtypeStruct((N, nclass), jnp.float32),
        jax.ShapeDtypeStruct((N, N_ATT, Lv), jnp.float32),
    ]

    probs, wts1 = pl.pallas_call(
        _kernel,
        out_shape=out_shape,
        grid_spec=pltpu.PrefetchScalarGridSpec(
            num_scalar_prefetch=0,
            grid=(nb,),
            in_specs=in_specs,
            out_specs=out_specs,
        ),
        compiler_params=pltpu.CompilerParams(
            dimension_semantics=("parallel",),
            vmem_limit_bytes=int(vmem_limit_bytes or _DEFAULT_VMEM_LIMIT),
        ),
    )(xin, Wv_b, Wf_b, sc, fcwv, fcwf, fcb2)

    return probs, wts1


def init_params(key, feature_dim, nclass):
    """Deterministic glorot-normal-style init matching the module's parameter shapes."""
    ks = jax.random.split(key, 10)

    def glorot(k, shape):
        if len(shape) == 2:
            fan_in, fan_out = shape[0], shape[1]
        else:
            fan_in = fan_out = float(np.sqrt(np.prod(shape)))
        s = np.sqrt(2.0 / (fan_in + fan_out))
        return (s * jax.random.normal(k, shape)).astype(jnp.float32)

    Wv = glorot(ks[0], (N_ATT, feature_dim))   # Conv1d weight (n, F, 1) squeezed
    cv = glorot(ks[1], (N_ATT,))               # Conv1d bias
    wv = glorot(ks[2], (N_ATT,))               # ShiftingAttention.w
    bv = glorot(ks[3], (N_ATT,))               # ShiftingAttention.b
    Wf = glorot(ks[4], (N_ATT, feature_dim))
    cf = glorot(ks[5], (N_ATT,))
    wf = glorot(ks[6], (N_ATT,))
    bf = glorot(ks[7], (N_ATT,))
    fcw = glorot(ks[8], (nclass, feature_dim * N_ATT * 2))  # nn.Linear weight (out, in)
    fcb = glorot(ks[9], (nclass,))
    return (Wv, cv, wv, bv, Wf, cf, wf, bf, fcw, fcb)


def reference_forward(x, params):
    """Pure-numpy float64 reference of the PyTorch forward (eval mode)."""
    x = np.asarray(x, dtype=np.float64)
    Wv, cv, wv, bv, Wf, cf, wf, bf, fcw, fcb = [
        np.asarray(p, dtype=np.float64) for p in params
    ]

    def shift(xs, W, c, w, b):
        s = np.einsum('nlf,cf->ncl', xs, W) + c[None, :, None]
        s = s - s.max(-1, keepdims=True)
        e = np.exp(s)
        att = e / e.sum(-1, keepdims=True)
        out = np.einsum('ncl,nlf->ncf', att, xs)
        o = out * w[None, :, None] + b[None, :, None]
        norm2 = np.linalg.norm(o, axis=-1, keepdims=True)
        o = o / norm2 / np.sqrt(N_ATT)
        return o.reshape(o.shape[0], -1), att

    ov, att1 = shift(x[:, :SPLIT, :], Wv, cv, wv, bv)
    of, _ = shift(x[:, SPLIT:, :], Wf, cf, wf, bf)
    feat = np.concatenate([ov, of], axis=1)
    logits = feat @ fcw.T + fcb
    logits = logits - logits.max(-1, keepdims=True)
    e = np.exp(logits)
    probs = e / e.sum(-1, keepdims=True)
    return probs, att1


if __name__ == "__main__":
    FEATURE_DIM = 128
    NCLASS = 2
    BATCH = 5
    L_TOTAL = SPLIT + 16   # 150 "video" steps + 16 "face" steps (module hard-codes the split)

    key = jax.random.PRNGKey(0)
    x = jax.random.normal(key, (BATCH, L_TOTAL, FEATURE_DIM), dtype=jnp.float32)
    params = init_params(jax.random.PRNGKey(42), FEATURE_DIM, NCLASS)
    prepared = prepare_params(params, FEATURE_DIM, NCLASS)

    probs, weights1 = attention_clusters_multimodal(x, prepared, NCLASS)
    jax.block_until_ready((probs, weights1))

    ref_probs, ref_w1 = reference_forward(x, params)
    np.testing.assert_allclose(np.asarray(probs), ref_probs, rtol=1e-2, atol=1e-3)
    np.testing.assert_allclose(np.asarray(weights1), ref_w1, rtol=1e-2, atol=1e-3)

    print("KERNEL_OK")
</pallas_src>

<mosaic_0001>
module attributes {stable_mosaic.version = 11 : i64} {
  func.func @_kernel(%arg0: i32, %arg1: memref<5x166x128xf32, #tpu.memory_space<vmem>>, %arg2: memref<5x5x128xf32, #tpu.memory_space<vmem>>, %arg3: memref<5x5x128xf32, #tpu.memory_space<vmem>>, %arg4: memref<4x5x1xf32, #tpu.memory_space<vmem>>, %arg5: memref<2x5x128xf32, #tpu.memory_space<vmem>>, %arg6: memref<2x5x128xf32, #tpu.memory_space<vmem>>, %arg7: memref<1x2xf32, #tpu.memory_space<vmem>>, %arg8: memref<5x2xf32, #tpu.memory_space<vmem>>, %arg9: memref<5x5x150xf32, #tpu.memory_space<vmem>>) attributes {dimension_semantics = [#tpu.dimension_semantics<parallel>], iteration_bounds = array<i64: 1>, scalar_prefetch = 0 : i64, scratch_operands = 0 : i64, tpu.core_type = #tpu.core_type<tc>, window_params = [{transform_indices = @transform_0, window_bounds = array<i64: 5, 166, 128>}, {pipeline_mode = #tpu.pipeline_mode<synchronous>, transform_indices = @transform_1, window_bounds = array<i64: 5, 5, 128>}, {pipeline_mode = #tpu.pipeline_mode<synchronous>, transform_indices = @transform_2, window_bounds = array<i64: 5, 5, 128>}, {pipeline_mode = #tpu.pipeline_mode<synchronous>, transform_indices = @transform_3, window_bounds = array<i64: 4, 5, 1>}, {pipeline_mode = #tpu.pipeline_mode<synchronous>, transform_indices = @transform_4, window_bounds = array<i64: 2, 5, 128>}, {pipeline_mode = #tpu.pipeline_mode<synchronous>, transform_indices = @transform_5, window_bounds = array<i64: 2, 5, 128>}, {pipeline_mode = #tpu.pipeline_mode<synchronous>, transform_indices = @transform_6, window_bounds = array<i64: 1, 2>}, {transform_indices = @transform_7, window_bounds = array<i64: 5, 2>}, {transform_indices = @transform_8, window_bounds = array<i64: 5, 5, 150>}]} {
    %c0 = arith.constant 0 : index
    %c0_0 = arith.constant 0 : index
    %c0_1 = arith.constant 0 : index
    %0 = vector.load %arg1[%c0, %c0_0, %c0_1] : memref<5x166x128xf32, #tpu.memory_space<vmem>>, vector<5x150x128xf32>
    %c0_2 = arith.constant 0 : index
    %c150 = arith.constant 150 : index
    %c0_3 = arith.constant 0 : index
    %1 = vector.load %arg1[%c0_2, %c150, %c0_3] : memref<5x166x128xf32, #tpu.memory_space<vmem>>, vector<5x16x128xf32>
    %c0_4 = arith.constant 0 : index
    %c0_5 = arith.constant 0 : index
    %c0_6 = arith.constant 0 : index
    %2 = vector.load %arg4[%c0_4, %c0_5, %c0_6] : memref<4x5x1xf32, #tpu.memory_space<vmem>>, vector<4x5x1xf32>
    %c0_7 = arith.constant 0 : index
    %c0_8 = arith.constant 0 : index
    %c0_9 = arith.constant 0 : index
    %3 = vector.load %arg2[%c0_7, %c0_8, %c0_9] : memref<5x5x128xf32, #tpu.memory_space<vmem>>, vector<5x5x128xf32>
    %4 = vector.extract_strided_slice %2 {offsets = [0, 0, 0], sizes = [1, 5, 1], strides = [1, 1, 1]} : vector<4x5x1xf32> to vector<1x5x1xf32>
    %5 = vector.extract_strided_slice %2 {offsets = [1, 0, 0], sizes = [1, 5, 1], strides = [1, 1, 1]} : vector<4x5x1xf32> to vector<1x5x1xf32>
    "tpu.trace_start"() <{level = 10 : i32, message = "bnf,blf->bnl"}> : () -> ()
    %cst = arith.constant dense<0.000000e+00> : vector<5x5x150xf32>
    %6 = tpu.matmul %3, %0, %cst {dimension_numbers = #tpu.dot_dimension_numbers<[2], [2], [1], [1], [0, 0, 0, 1, 1, 1], [0], [0]>} : vector<5x5x128xf32>, vector<5x150x128xf32>, vector<5x5x150xf32> -> vector<5x5x150xf32>
    "tpu.trace_stop"() : () -> ()
    %cst_10 = arith.constant dense<0xFF800000> : vector<5x5xf32>
    %7 = vector.multi_reduction <maximumf>, %6, %cst_10 [2] : vector<5x5x150xf32> to vector<5x5xf32>
    %8 = vector.shape_cast %7 : vector<5x5xf32> to vector<5x5x1xf32>
    %9 = vector.broadcast %8 : vector<5x5x1xf32> to vector<5x5x150xf32>
    %10 = arith.subf %6, %9 : vector<5x5x150xf32>
    %11 = math.exp %10 : vector<5x5x150xf32>
    %cst_11 = arith.constant dense<0.000000e+00> : vector<5x5xf32>
    %12 = vector.multi_reduction <add>, %11, %cst_11 [2] : vector<5x5x150xf32> to vector<5x5xf32>
    %13 = vector.shape_cast %12 : vector<5x5xf32> to vector<5x5x1xf32>
    %14 = tpu.reciprocal %13 {approx = true} : vector<5x5x1xf32> -> vector<5x5x1xf32>
    %15 = vector.broadcast %14 : vector<5x5x1xf32> to vector<5x5x150xf32>
    %16 = arith.mulf %11, %15 : vector<5x5x150xf32>
    "tpu.trace_start"() <{level = 10 : i32, message = "bnl,blf->bnf"}> : () -> ()
    %cst_12 = arith.constant dense<0.000000e+00> : vector<5x5x128xf32>
    %17 = tpu.matmul %16, %0, %cst_12 {dimension_numbers = #tpu.dot_dimension_numbers<[2], [1], [1], [2], [0, 0, 0, 1, 1, 2], [0], [0]>} : vector<5x5x150xf32>, vector<5x150x128xf32>, vector<5x5x128xf32> -> vector<5x5x128xf32>
    "tpu.trace_stop"() : () -> ()
    %18 = vector.broadcast %4 : vector<1x5x1xf32> to vector<5x5x128xf32>
    %19 = arith.mulf %17, %18 : vector<5x5x128xf32>
    %20 = vector.broadcast %5 : vector<1x5x1xf32> to vector<5x5x128xf32>
    %21 = arith.addf %19, %20 : vector<5x5x128xf32>
    %22 = arith.mulf %21, %21 : vector<5x5x128xf32>
    %cst_13 = arith.constant dense<0.000000e+00> : vector<5x5xf32>
    %23 = vector.multi_reduction <add>, %22, %cst_13 [2] : vector<5x5x128xf32> to vector<5x5xf32>
    %24 = vector.shape_cast %23 : vector<5x5xf32> to vector<5x5x1xf32>
    %25 = math.rsqrt %24 : vector<5x5x1xf32>
    %cst_14 = arith.constant 0.44721359 : f32
    %26 = vector.broadcast %cst_14 : f32 to vector<5x5x1xf32>
    %27 = arith.mulf %25, %26 : vector<5x5x1xf32>
    %28 = vector.broadcast %27 : vector<5x5x1xf32> to vector<5x5x128xf32>
    %29 = arith.mulf %21, %28 : vector<5x5x128xf32>
    %c0_15 = arith.constant 0 : index
    %c0_16 = arith.constant 0 : index
    %c0_17 = arith.constant 0 : index
    %30 = vector.load %arg3[%c0_15, %c0_16, %c0_17] : memref<5x5x128xf32, #tpu.memory_space<vmem>>, vector<5x5x128xf32>
    %31 = vector.extract_strided_slice %2 {offsets = [2, 0, 0], sizes = [1, 5, 1], strides = [1, 1, 1]} : vector<4x5x1xf32> to vector<1x5x1xf32>
    %32 = vector.extract_strided_slice %2 {offsets = [3, 0, 0], sizes = [1, 5, 1], strides = [1, 1, 1]} : vector<4x5x1xf32> to vector<1x5x1xf32>
    "tpu.trace_start"() <{level = 10 : i32, message = "bnf,blf->bnl"}> : () -> ()
    %cst_18 = arith.constant dense<0.000000e+00> : vector<5x5x16xf32>
    %33 = tpu.matmul %30, %1, %cst_18 {dimension_numbers = #tpu.dot_dimension_numbers<[2], [2], [1], [1], [0, 0, 0, 1, 1, 1], [0], [0]>} : vector<5x5x128xf32>, vector<5x16x128xf32>, vector<5x5x16xf32> -> vector<5x5x16xf32>
    "tpu.trace_stop"() : () -> ()
    %cst_19 = arith.constant dense<0xFF800000> : vector<5x5xf32>
    %34 = vector.multi_reduction <maximumf>, %33, %cst_19 [2] : vector<5x5x16xf32> to vector<5x5xf32>
    %35 = vector.shape_cast %34 : vector<5x5xf32> to vector<5x5x1xf32>
    %36 = vector.broadcast %35 : vector<5x5x1xf32> to vector<5x5x16xf32>
    %37 = arith.subf %33, %36 : vector<5x5x16xf32>
    %38 = math.exp %37 : vector<5x5x16xf32>
    %cst_20 = arith.constant dense<0.000000e+00> : vector<5x5xf32>
    %39 = vector.multi_reduction <add>, %38, %cst_20 [2] : vector<5x5x16xf32> to vector<5x5xf32>
    %40 = vector.shape_cast %39 : vector<5x5xf32> to vector<5x5x1xf32>
    %41 = tpu.reciprocal %40 {approx = true} : vector<5x5x1xf32> -> vector<5x5x1xf32>
    %42 = vector.broadcast %41 : vector<5x5x1xf32> to vector<5x5x16xf32>
    %43 = arith.mulf %38, %42 : vector<5x5x16xf32>
    "tpu.trace_start"() <{level = 10 : i32, message = "bnl,blf->bnf"}> : () -> ()
    %cst_21 = arith.constant dense<0.000000e+00> : vector<5x5x128xf32>
    %44 = tpu.matmul %43, %1, %cst_21 {dimension_numbers = #tpu.dot_dimension_numbers<[2], [1], [1], [2], [0, 0, 0, 1, 1, 2], [0], [0]>} : vector<5x5x16xf32>, vector<5x16x128xf32>, vector<5x5x128xf32> -> vector<5x5x128xf32>
    "tpu.trace_stop"() : () -> ()
    %45 = vector.broadcast %31 : vector<1x5x1xf32> to vector<5x5x128xf32>
    %46 = arith.mulf %44, %45 : vector<5x5x128xf32>
    %47 = vector.broadcast %32 : vector<1x5x1xf32> to vector<5x5x128xf32>
    %48 = arith.addf %46, %47 : vector<5x5x128xf32>
    %49 = arith.mulf %48, %48 : vector<5x5x128xf32>
    %cst_22 = arith.constant dense<0.000000e+00> : vector<5x5xf32>
    %50 = vector.multi_reduction <add>, %49, %cst_22 [2] : vector<5x5x128xf32> to vector<5x5xf32>
    %51 = vector.shape_cast %50 : vector<5x5xf32> to vector<5x5x1xf32>
    %52 = math.rsqrt %51 : vector<5x5x1xf32>
    %cst_23 = arith.constant 0.44721359 : f32
    %53 = vector.broadcast %cst_23 : f32 to vector<5x5x1xf32>
    %54 = arith.mulf %52, %53 : vector<5x5x1xf32>
    %55 = vector.broadcast %54 : vector<5x5x1xf32> to vector<5x5x128xf32>
    %56 = arith.mulf %48, %55 : vector<5x5x128xf32>
    %c0_24 = arith.constant 0 : index
    %c0_25 = arith.constant 0 : index
    %c0_26 = arith.constant 0 : index
    %57 = vector.load %arg5[%c0_24, %c0_25, %c0_26] : memref<2x5x128xf32, #tpu.memory_space<vmem>>, vector<2x5x128xf32>
    %c0_27 = arith.constant 0 : index
    %c0_28 = arith.constant 0 : index
    %c0_29 = arith.constant 0 : index
    %58 = vector.load %arg6[%c0_27, %c0_28, %c0_29] : memref<2x5x128xf32, #tpu.memory_space<vmem>>, vector<2x5x128xf32>
    %59 = vector.shape_cast %29 : vector<5x5x128xf32> to vector<5x1x5x128xf32>
    %60 = vector.shape_cast %57 : vector<2x5x128xf32> to vector<1x2x5x128xf32>
    %61 = vector.broadcast %59 : vector<5x1x5x128xf32> to vector<5x2x5x128xf32>
    %62 = vector.broadcast %60 : vector<1x2x5x128xf32> to vector<5x2x5x128xf32>
    %63 = arith.mulf %61, %62 : vector<5x2x5x128xf32>
    %cst_30 = arith.constant dense<0.000000e+00> : vector<5x2x5xf32>
    %64 = vector.multi_reduction <add>, %63, %cst_30 [3] : vector<5x2x5x128xf32> to vector<5x2x5xf32>
    %cst_31 = arith.constant dense<0.000000e+00> : vector<5x2xf32>
    %65 = vector.multi_reduction <add>, %64, %cst_31 [2] : vector<5x2x5xf32> to vector<5x2xf32>
    %66 = vector.shape_cast %56 : vector<5x5x128xf32> to vector<5x1x5x128xf32>
    %67 = vector.shape_cast %58 : vector<2x5x128xf32> to vector<1x2x5x128xf32>
    %68 = vector.broadcast %66 : vector<5x1x5x128xf32> to vector<5x2x5x128xf32>
    %69 = vector.broadcast %67 : vector<1x2x5x128xf32> to vector<5x2x5x128xf32>
    %70 = arith.mulf %68, %69 : vector<5x2x5x128xf32>
    %cst_32 = arith.constant dense<0.000000e+00> : vector<5x2x5xf32>
    %71 = vector.multi_reduction <add>, %70, %cst_32 [3] : vector<5x2x5x128xf32> to vector<5x2x5xf32>
    %cst_33 = arith.constant dense<0.000000e+00> : vector<5x2xf32>
    %72 = vector.multi_reduction <add>, %71, %cst_33 [2] : vector<5x2x5xf32> to vector<5x2xf32>
    %73 = arith.addf %65, %72 : vector<5x2xf32>
    %c0_34 = arith.constant 0 : index
    %c0_35 = arith.constant 0 : index
    %74 = vector.load %arg7[%c0_34, %c0_35] : memref<1x2xf32, #tpu.memory_space<vmem>>, vector<1x2xf32>
    %75 = vector.broadcast %74 : vector<1x2xf32> to vector<5x2xf32>
    %76 = arith.addf %73, %75 : vector<5x2xf32>
    %cst_36 = arith.constant dense<0xFF800000> : vector<5xf32>
    %77 = vector.multi_reduction <maximumf>, %76, %cst_36 [1] : vector<5x2xf32> to vector<5xf32>
    %78 = vector.shape_cast %77 : vector<5xf32> to vector<5x1xf32>
    %79 = vector.broadcast %78 : vector<5x1xf32> to vector<5x2xf32>
    %80 = arith.subf %76, %79 : vector<5x2xf32>
    %81 = math.exp %80 : vector<5x2xf32>
    %cst_37 = arith.constant dense<0.000000e+00> : vector<5xf32>
    %82 = vector.multi_reduction <add>, %81, %cst_37 [1] : vector<5x2xf32> to vector<5xf32>
    %83 = vector.shape_cast %82 : vector<5xf32> to vector<5x1xf32>
    %84 = vector.broadcast %83 : vector<5x1xf32> to vector<5x2xf32>
    %85 = arith.divf %81, %84 : vector<5x2xf32>
    %c0_38 = arith.constant 0 : index
    %c0_39 = arith.constant 0 : index
    %86 = vector.load %arg8[%c0_38, %c0_39] : memref<5x2xf32, #tpu.memory_space<vmem>>, vector<5x2xf32>
    tpu.vector_store %arg8[%c0_38, %c0_39], %85 {strides = array<i32>} : memref<5x2xf32, #tpu.memory_space<vmem>>, vector<5x2xf32>,
    %c0_40 = arith.constant 0 : index
    %c0_41 = arith.constant 0 : index
    %c0_42 = arith.constant 0 : index
    %87 = vector.load %arg9[%c0_40, %c0_41, %c0_42] : memref<5x5x150xf32, #tpu.memory_space<vmem>>, vector<5x5x150xf32>
    tpu.vector_store %arg9[%c0_40, %c0_41, %c0_42], %16 {strides = array<i32>} : memref<5x5x150xf32, #tpu.memory_space<vmem>>, vector<5x5x150xf32>,
    return
  }
  func.func @transform_0(%arg0: i32) -> (i32, i32, i32) {
    %c0_i32 = arith.constant 0 : i32
    %c0_i32_0 = arith.constant 0 : i32
    %c0_i32_1 = arith.constant 0 : i32
    return %arg0, %c0_i32, %c0_i32_0 : i32, i32, i32
  }
  func.func @transform_1(%arg0: i32) -> (i32, i32, i32) {
    %c0_i32 = arith.constant 0 : i32
    %c0_i32_0 = arith.constant 0 : i32
    %c0_i32_1 = arith.constant 0 : i32
    %c0_i32_2 = arith.constant 0 : i32
    return %c0_i32, %c0_i32_0, %c0_i32_1 : i32, i32, i32
  }
  func.func @transform_2(%arg0: i32) -> (i32, i32, i32) {
    %c0_i32 = arith.constant 0 : i32
    %c0_i32_0 = arith.constant 0 : i32
    %c0_i32_1 = arith.constant 0 : i32
    %c0_i32_2 = arith.constant 0 : i32
    return %c0_i32, %c0_i32_0, %c0_i32_1 : i32, i32, i32
  }
  func.func @transform_3(%arg0: i32) -> (i32, i32, i32) {
    %c0_i32 = arith.constant 0 : i32
    %c0_i32_0 = arith.constant 0 : i32
    %c0_i32_1 = arith.constant 0 : i32
    %c0_i32_2 = arith.constant 0 : i32
    return %c0_i32, %c0_i32_0, %c0_i32_1 : i32, i32, i32
  }
  func.func @transform_4(%arg0: i32) -> (i32, i32, i32) {
    %c0_i32 = arith.constant 0 : i32
    %c0_i32_0 = arith.constant 0 : i32
    %c0_i32_1 = arith.constant 0 : i32
    %c0_i32_2 = arith.constant 0 : i32
    return %c0_i32, %c0_i32_0, %c0_i32_1 : i32, i32, i32
  }
  func.func @transform_5(%arg0: i32) -> (i32, i32, i32) {
    %c0_i32 = arith.constant 0 : i32
    %c0_i32_0 = arith.constant 0 : i32
    %c0_i32_1 = arith.constant 0 : i32
    %c0_i32_2 = arith.constant 0 : i32
    return %c0_i32, %c0_i32_0, %c0_i32_1 : i32, i32, i32
  }
  func.func @transform_6(%arg0: i32) -> (i32, i32) {
    %c0_i32 = arith.constant 0 : i32
    %c0_i32_0 = arith.constant 0 : i32
    %c0_i32_1 = arith.constant 0 : i32
    return %c0_i32, %c0_i32_0 : i32, i32
  }
  func.func @transform_7(%arg0: i32) -> (i32, i32) {
    %c0_i32 = arith.constant 0 : i32
    %c0_i32_0 = arith.constant 0 : i32
    return %arg0, %c0_i32 : i32, i32
  }
  func.func @transform_8(%arg0: i32) -> (i32, i32, i32) {
    %c0_i32 = arith.constant 0 : i32
    %c0_i32_0 = arith.constant 0 : i32
    %c0_i32_1 = arith.constant 0 : i32
    return %arg0, %c0_i32, %c0_i32_0 : i32, i32, i32
  }
}

</mosaic_0001>

<llo_original>
// kernel: tpu_custom_call.1
$region0: #{tpu_custom_call.1}
  #allocation0 [shape = 'u32[]', space=smem, size = 0x4, offset = 0x4, fixed_abs, tag = 'smem constant byte address 0x4 - core index']
  #allocation1 [shape = 'u32[144,128]{1,0:T(1,128)}', space=vmem, size = 0x12000, scoped, tag = 'internal scratch']
  %s0 = inlined_call_operand.hbm [shape: f32[5,166,128], index: 0, kind: input, shape index: {}]
  %s1 = inlined_call_operand.vmem [shape: f32[5,5,128], index: 1, kind: input, shape index: {}]
  %s2 = inlined_call_operand.vmem [shape: f32[5,5,128], index: 2, kind: input, shape index: {}]
  %s3 = inlined_call_operand.vmem [shape: f32[4,5,1], index: 3, kind: input, shape index: {}]
  %s4 = inlined_call_operand.vmem [shape: f32[2,5,128], index: 4, kind: input, shape index: {}]
  %s5 = inlined_call_operand.vmem [shape: f32[2,5,128], index: 5, kind: input, shape index: {}]
  %s6 = inlined_call_operand.vmem [shape: f32[1,2], index: 6, kind: input, shape index: {}]
  %s7 = inlined_call_operand.vmem [shape: f32[5,2], index: 7, kind: output, shape index: {0}]
  %s8 = inlined_call_operand.hbm [shape: f32[5,5,150], index: 8, kind: output, shape index: {1}]
  %9 = xla_tuple %s7, %s8
  %s10 = sld [smem:[#allocation0]]
  $region50: #{tpu_custom_call.1} parent=0
    _
  %s12 = ssub.s32 1, %s10
  %s13 = scalar_select 0, %s12, %s10
  $region1: #{tpu_custom_call.1} parent=0
    #allocation2 [shape = 'u8[430080]{0}', space=vmem, size = 0x69000, scoped, tag = 'input window, operand 0, single buffered']
    #allocation3 [shape = 's32[1]{0}', space=sflag, size = 0x4, scoped, tag = 'scoped memory for tpu_custom_call.1']
    #allocation4 [shape = 's32[1]{0}', space=sflag, size = 0x4, scoped, tag = 'scoped memory for tpu_custom_call.1']
    #allocation5 [shape = 'u8[40960]{0}', space=vmem, size = 0xa000, scoped, tag = 'output window, operand 1, single buffered']
    %14 = vsyncpa [#allocation3], 0
    %15 = vsyncpa [#allocation4], 0
    // Predicated region
    $region2: #{tpu_custom_call.1} parent=1 // pred_check
      _
    $region3: #{tpu_custom_call.1} parent=1 // pred_check_branch
      %17 = sbr.rel (0) target = $region5
    $region4: #{tpu_custom_call.1} parent=1 // pred_region
      %s19 = ssub.s32 13440, 13440
      %20 = vsyncadd [#allocation3], %s19
      %s21 = sshll.u32 [#allocation2], 4
      %s22 = int_to_ptr.vmem [resolvable:$true] %s21
      %27 = dma.hbm_to_vmem [thread:$0]  %s0, 13440, %s22, [#allocation3], 128, 128, 8
    $region5: #{tpu_custom_call.1} parent=1 // pred_fallthru
      _
    // Predicated region
    $region6: #{tpu_custom_call.1} parent=1 // pred_check
      _
    $region7: #{tpu_custom_call.1} parent=1 // pred_check_branch
      %29 = sbr.rel (0) target = $region9
    $region8: #{tpu_custom_call.1} parent=1 // pred_region
      _
    $region9: #{tpu_custom_call.1} parent=1 // pred_fallthru
      _
    // Predicated region
    $region10: #{tpu_custom_call.1} parent=1 // pred_check
      _
    $region11: #{tpu_custom_call.1} parent=1 // pred_check_branch
      %31 = sbr.rel (0) target = $region13
    $region12: #{tpu_custom_call.1} parent=1 // pred_region
      _
    $region13: #{tpu_custom_call.1} parent=1 // pred_fallthru
      _
    // Predicated region
    $region14: #{tpu_custom_call.1} parent=1 // pred_check
      _
    $region15: #{tpu_custom_call.1} parent=1 // pred_check_branch
      %33 = sbr.rel (0) target = $region17
    $region16: #{tpu_custom_call.1} parent=1 // pred_region
      _
    $region17: #{tpu_custom_call.1} parent=1 // pred_fallthru
      _
    // Predicated region
    $region18: #{tpu_custom_call.1} parent=1 // pred_check
      _
    $region19: #{tpu_custom_call.1} parent=1 // pred_check_branch
      %35 = sbr.rel (0) target = $region21
    $region20: #{tpu_custom_call.1} parent=1 // pred_region
      _
    $region21: #{tpu_custom_call.1} parent=1 // pred_fallthru
      _
    // Predicated region
    $region22: #{tpu_custom_call.1} parent=1 // pred_check
      _
    $region23: #{tpu_custom_call.1} parent=1 // pred_check_branch
      %37 = sbr.rel (0) target = $region25
    $region24: #{tpu_custom_call.1} parent=1 // pred_region
      _
    $region25: #{tpu_custom_call.1} parent=1 // pred_fallthru
      _
    // Predicated region
    $region26: #{tpu_custom_call.1} parent=1 // pred_check
      _
    $region27: #{tpu_custom_call.1} parent=1 // pred_check_branch
      %39 = sbr.rel (0) target = $region29
    $region28: #{tpu_custom_call.1} parent=1 // pred_region
      _
    $region29: #{tpu_custom_call.1} parent=1 // pred_fallthru
      _
    // Predicated region
    $region30: #{tpu_custom_call.1} parent=1 // pred_check
      _
    $region31: #{tpu_custom_call.1} parent=1 // pred_check_branch
      %41 = sbr.rel (0) target = $region33
    $region32: #{tpu_custom_call.1} parent=1 // pred_region
      %42 = dma.done [#allocation3], 13440
    $region33: #{tpu_custom_call.1} parent=1 // pred_fallthru
      _
    %v43 = vld [vmem:[#allocation2] sm:$0xff]
    %v44 = vld [vmem:[#allocation2 + $0x8] sm:$0xff]
    %v45 = vld [vmem:[#allocation2 + $0x10] sm:$0xff]
    %v46 = vld [vmem:[#allocation2 + $0x18] sm:$0xff]
    %v47 = vld [vmem:[#allocation2 + $0x20] sm:$0xff]
    %v48 = vld [vmem:[#allocation2 + $0x28] sm:$0xff]
    %v49 = vld [vmem:[#allocation2 + $0x30] sm:$0xff]
    %v50 = vld [vmem:[#allocation2 + $0x38] sm:$0xff]
    %v51 = vld [vmem:[#allocation2 + $0x40] sm:$0xff]
    %v52 = vld [vmem:[#allocation2 + $0x48] sm:$0xff]
    %v53 = vld [vmem:[#allocation2 + $0x50] sm:$0xff]
    %v54 = vld [vmem:[#allocation2 + $0x58] sm:$0xff]
    %v55 = vld [vmem:[#allocation2 + $0x60] sm:$0xff]
    %v56 = vld [vmem:[#allocation2 + $0x68] sm:$0xff]
    %v57 = vld [vmem:[#allocation2 + $0x70] sm:$0xff]
    %v58 = vld [vmem:[#allocation2 + $0x78] sm:$0xff]
    %v59 = vld [vmem:[#allocation2 + $0x80] sm:$0xff]
    %v60 = vld [vmem:[#allocation2 + $0x88] sm:$0xff]
    %v61 = vld [vmem:[#allocation2 + $0x90] sm:$0x3f]
    %v62 = vld [vmem:[#allocation2 + $0xa8] sm:$0xff]
    %v63 = vld [vmem:[#allocation2 + $0xb0] sm:$0xff]
    %v64 = vld [vmem:[#allocation2 + $0xb8] sm:$0xff]
    %v65 = vld [vmem:[#allocation2 + $0xc0] sm:$0xff]
    %v66 = vld [vmem:[#allocation2 + $0xc8] sm:$0xff]
    %v67 = vld [vmem:[#allocation2 + $0xd0] sm:$0xff]
    %v68 = vld [vmem:[#allocation2 + $0xd8] sm:$0xff]
    %v69 = vld [vmem:[#allocation2 + $0xe0] sm:$0xff]
    %v70 = vld [vmem:[#allocation2 + $0xe8] sm:$0xff]
    %v71 = vld [vmem:[#allocation2 + $0xf0] sm:$0xff]
    %v72 = vld [vmem:[#allocation2 + $0xf8] sm:$0xff]
    %v73 = vld [vmem:[#allocation2 + $0x100] sm:$0xff]
    %v74 = vld [vmem:[#allocation2 + $0x108] sm:$0xff]
    %v75 = vld [vmem:[#allocation2 + $0x110] sm:$0xff]
    %v76 = vld [vmem:[#allocation2 + $0x118] sm:$0xff]
    %v77 = vld [vmem:[#allocation2 + $0x120] sm:$0xff]
    %v78 = vld [vmem:[#allocation2 + $0x128] sm:$0xff]
    %v79 = vld [vmem:[#allocation2 + $0x130] sm:$0xff]
    %v80 = vld [vmem:[#allocation2 + $0x138] sm:$0x3f]
    %v81 = vld [vmem:[#allocation2 + $0x150] sm:$0xff]
    %v82 = vld [vmem:[#allocation2 + $0x158] sm:$0xff]
    %v83 = vld [vmem:[#allocation2 + $0x160] sm:$0xff]
    %v84 = vld [vmem:[#allocation2 + $0x168] sm:$0xff]
    %v85 = vld [vmem:[#allocation2 + $0x170] sm:$0xff]
    %v86 = vld [vmem:[#allocation2 + $0x178] sm:$0xff]
    %v87 = vld [vmem:[#allocation2 + $0x180] sm:$0xff]
    %v88 = vld [vmem:[#allocation2 + $0x188] sm:$0xff]
    %v89 = vld [vmem:[#allocation2 + $0x190] sm:$0xff]
    %v90 = vld [vmem:[#allocation2 + $0x198] sm:$0xff]
    %v91 = vld [vmem:[#allocation2 + $0x1a0] sm:$0xff]
    %v92 = vld [vmem:[#allocation2 + $0x1a8] sm:$0xff]
    %v93 = vld [vmem:[#allocation2 + $0x1b0] sm:$0xff]
    %v94 = vld [vmem:[#allocation2 + $0x1b8] sm:$0xff]
    %v95 = vld [vmem:[#allocation2 + $0x1c0] sm:$0xff]
    %v96 = vld [vmem:[#allocation2 + $0x1c8] sm:$0xff]
    %v97 = vld [vmem:[#allocation2 + $0x1d0] sm:$0xff]
    %v98 = vld [vmem:[#allocation2 + $0x1d8] sm:$0xff]
    %v99 = vld [vmem:[#allocation2 + $0x1e0] sm:$0x3f]
    %v100 = vld [vmem:[#allocation2 + $0x1f8] sm:$0xff]
    %v101 = vld [vmem:[#allocation2 + $0x200] sm:$0xff]
    %v102 = vld [vmem:[#allocation2 + $0x208] sm:$0xff]
    %v103 = vld [vmem:[#allocation2 + $0x210] sm:$0xff]
    %v104 = vld [vmem:[#allocation2 + $0x218] sm:$0xff]
    %v105 = vld [vmem:[#allocation2 + $0x220] sm:$0xff]
    %v106 = vld [vmem:[#allocation2 + $0x228] sm:$0xff]
    %v107 = vld [vmem:[#allocation2 + $0x230] sm:$0xff]
    %v108 = vld [vmem:[#allocation2 + $0x238] sm:$0xff]
    %v109 = vld [vmem:[#allocation2 + $0x240] sm:$0xff]
    %v110 = vld [vmem:[#allocation2 + $0x248] sm:$0xff]
    %v111 = vld [vmem:[#allocation2 + $0x250] sm:$0xff]
    %v112 = vld [vmem:[#allocation2 + $0x258] sm:$0xff]
    %v113 = vld [vmem:[#allocation2 + $0x260] sm:$0xff]
    %v114 = vld [vmem:[#allocation2 + $0x268] sm:$0xff]
    %v115 = vld [vmem:[#allocation2 + $0x270] sm:$0xff]
    %v116 = vld [vmem:[#allocation2 + $0x278] sm:$0xff]
    %v117 = vld [vmem:[#allocation2 + $0x280] sm:$0xff]
    %v118 = vld [vmem:[#allocation2 + $0x288] sm:$0x3f]
    %v119 = vld [vmem:[#allocation2 + $0x2a0] sm:$0xff]
    %v120 = vld [vmem:[#allocation2 + $0x2a8] sm:$0xff]
    %v121 = vld [vmem:[#allocation2 + $0x2b0] sm:$0xff]
    %v122 = vld [vmem:[#allocation2 + $0x2b8] sm:$0xff]
    %v123 = vld [vmem:[#allocation2 + $0x2c0] sm:$0xff]
    %v124 = vld [vmem:[#allocation2 + $0x2c8] sm:$0xff]
    %v125 = vld [vmem:[#allocation2 + $0x2d0] sm:$0xff]
    %v126 = vld [vmem:[#allocation2 + $0x2d8] sm:$0xff]
    %v127 = vld [vmem:[#allocation2 + $0x2e0] sm:$0xff]
    %v128 = vld [vmem:[#allocation2 + $0x2e8] sm:$0xff]
    %v129 = vld [vmem:[#allocation2 + $0x2f0] sm:$0xff]
    %v130 = vld [vmem:[#allocation2 + $0x2f8] sm:$0xff]
    %v131 = vld [vmem:[#allocation2 + $0x300] sm:$0xff]
    %v132 = vld [vmem:[#allocation2 + $0x308] sm:$0xff]
    %v133 = vld [vmem:[#allocation2 + $0x310] sm:$0xff]
    %v134 = vld [vmem:[#allocation2 + $0x318] sm:$0xff]
    %v135 = vld [vmem:[#allocation2 + $0x320] sm:$0xff]
    %v136 = vld [vmem:[#allocation2 + $0x328] sm:$0xff]
    %v137 = vld [vmem:[#allocation2 + $0x330] sm:$0x3f]
    %v138 = vld [vmem:[#allocation2 + $0x96] sm:$0xff]
    %v139 = vld [vmem:[#allocation2 + $0x9e] sm:$0xff]
    %v140 = vld [vmem:[#allocation2 + $0x13e] sm:$0xff]
    %v141 = vld [vmem:[#allocation2 + $0x146] sm:$0xff]
    %v142 = vld [vmem:[#allocation2 + $0x1e6] sm:$0xff]
    %v143 = vld [vmem:[#allocation2 + $0x1ee] sm:$0xff]
    %v144 = vld [vmem:[#allocation2 + $0x28e] sm:$0xff]
    %v145 = vld [vmem:[#allocation2 + $0x296] sm:$0xff]
    %v146 = vld [vmem:[#allocation2 + $0x336] sm:$0xff]
    %v147 = vld [vmem:[#allocation2 + $0x33e] sm:$0xff]
    %v148 = vld [vmem:[%s3] sm:$0x1f]
    %v149 = vld [vmem:[%s3 + $0x8] sm:$0x1f]
    %v150 = vld [vmem:[%s3 + $0x10] sm:$0x1f]
    %v151 = vld [vmem:[%s3 + $0x18] sm:$0x1f]
    %v152 = vld [vmem:[%s1] sm:$0x1f]
    %v153 = vld [vmem:[%s1 + $0x8] sm:$0x1f]
    %v154 = vld [vmem:[%s1 + $0x10] sm:$0x1f]
    %v155 = vld [vmem:[%s1 + $0x18] sm:$0x1f]
    %v156 = vld [vmem:[%s1 + $0x20] sm:$0x1f]
    %157 = vmatprep.subr.mxu0 0.0
    %158 = vmatpush1.xpose.msra.mxu0 %v58
    %159 = vmatprep.subr.mxu0 0.0
    %160 = vmatpush1.xpose.msra.mxu0 %v57
    %161 = vmatprep.subr.mxu0 0.0
    %162 = vmatpush1.xpose.msra.mxu0 %v56
    %163 = vmatprep.subr.mxu0 0.0
    %164 = vmatpush1.xpose.msra.mxu0 %v55
    %165 = vmatprep.subr.mxu0 0.0
    %166 = vmatpush1.xpose.msra.mxu0 %v54
    %167 = vmatprep.subr.mxu0 0.0
    %168 = vmatpush1.xpose.msra.mxu0 %v53
    %169 = vmatprep.subr.mxu0 0.0
    %170 = vmatpush1.xpose.msra.mxu0 %v52
    %171 = vmatprep.subr.mxu0 0.0
    %172 = vmatpush1.xpose.msra.mxu0 %v51
    %173 = vmatprep.subr.mxu0 0.0
    %174 = vmatpush1.xpose.msra.mxu0 %v50
    %175 = vmatprep.subr.mxu0 0.0
    %176 = vmatpush1.xpose.msra.mxu0 %v49
    %177 = vmatprep.subr.mxu0 0.0
    %178 = vmatpush1.xpose.msra.mxu0 %v48
    %179 = vmatprep.subr.mxu0 0.0
    %180 = vmatpush1.xpose.msra.mxu0 %v47
    %181 = vmatprep.subr.mxu0 0.0
    %182 = vmatpush1.xpose.msra.mxu0 %v46
    %183 = vmatprep.subr.mxu0 0.0
    %184 = vmatpush1.xpose.msra.mxu0 %v45
    %185 = vmatprep.subr.mxu0 0.0
    %186 = vmatpush1.xpose.msra.mxu0 %v44
    %187 = vmatprep.subr.mxu0 0.0
    %188 = vmatpush1.xpose.msra.mxu0 %v43
    %189 = vmatprep.subr.mxu0 0.0
    %190 = vmatpush2.xpose.msra.mxu0 0.0
    %191 = vmatprep.subr.mxu0 0.0
    %192 = vmatpush2.xpose.msra.mxu0 0.0
    %193 = vmatprep.subr.mxu0 0.0
    %194 = vmatpush2.xpose.msra.mxu0 0.0
    %195 = vmatprep.subr.mxu0 0.0
    %196 = vmatpush2.xpose.msra.mxu0 0.0
    %197 = vmatprep.subr.mxu0 0.0
    %198 = vmatpush2.xpose.msra.mxu0 0.0
    %199 = vmatprep.subr.mxu0 0.0
    %200 = vmatpush2.xpose.msra.mxu0 0.0
    %201 = vmatprep.subr.mxu0 0.0
    %202 = vmatpush2.xpose.msra.mxu0 0.0
    %203 = vmatprep.subr.mxu0 0.0
    %204 = vmatpush2.xpose.msra.mxu0 0.0
    %205 = vmatprep.subr.mxu0 0.0
    %206 = vmatpush2.xpose.msra.mxu0 0.0
    %207 = vmatprep.subr.mxu0 0.0
    %208 = vmatpush2.xpose.msra.mxu0 0.0
    %209 = vmatprep.subr.mxu0 0.0
    %210 = vmatpush2.xpose.msra.mxu0 0.0
    %211 = vmatprep.subr.mxu0 0.0
    %212 = vmatpush2.xpose.msra.mxu0 0.0
    %213 = vmatprep.subr.mxu0 0.0
    %214 = vmatpush2.xpose.msra.mxu0 0.0
    %215 = vmatprep.subr.mxu0 0.0
    %216 = vmatpush2.xpose.msra.mxu0 %v61
    %217 = vmatprep.subr.mxu0 0.0
    %218 = vmatpush2.xpose.msra.mxu0 %v60
    %219 = vmatprep.subr.mxu0 0.0
    %220 = vmatpush2.xpose.msra.mxu0 %v59
    %221 = vmatprep.mubr.f32.mxu0 0.0
    %222 = vmatmul.mubr.f32.gmra.mxu0 %v152
    %v223 = vpop.f32.mrf.mxu0
    %v224 = vadd.f32 0.0, %v223
    %v225 = vpop.f32.mrf.mxu0
    %v226 = vadd.f32 0.0, %v225
    %227 = vdwg.mxu0
    %228 = vmatprep.subr.mxu0 0.0
    %229 = vmatpush1.xpose.msra.mxu0 %v77
    %230 = vmatprep.subr.mxu0 0.0
    %231 = vmatpush1.xpose.msra.mxu0 %v76
    %232 = vmatprep.subr.mxu0 0.0
    %233 = vmatpush1.xpose.msra.mxu0 %v75
    %234 = vmatprep.subr.mxu0 0.0
    %235 = vmatpush1.xpose.msra.mxu0 %v74
    %236 = vmatprep.subr.mxu0 0.0
    %237 = vmatpush1.xpose.msra.mxu0 %v73
    %238 = vmatprep.subr.mxu0 0.0
    %239 = vmatpush1.xpose.msra.mxu0 %v72
    %240 = vmatprep.subr.mxu0 0.0
    %241 = vmatpush1.xpose.msra.mxu0 %v71
    %242 = vmatprep.subr.mxu0 0.0
    %243 = vmatpush1.xpose.msra.mxu0 %v70
    %244 = vmatprep.subr.mxu0 0.0
    %245 = vmatpush1.xpose.msra.mxu0 %v69
    %246 = vmatprep.subr.mxu0 0.0
    %247 = vmatpush1.xpose.msra.mxu0 %v68
    %248 = vmatprep.subr.mxu0 0.0
    %249 = vmatpush1.xpose.msra.mxu0 %v67
    %250 = vmatprep.subr.mxu0 0.0
    %251 = vmatpush1.xpose.msra.mxu0 %v66
    %252 = vmatprep.subr.mxu0 0.0
    %253 = vmatpush1.xpose.msra.mxu0 %v65
    %254 = vmatprep.subr.mxu0 0.0
    %255 = vmatpush1.xpose.msra.mxu0 %v64
    %256 = vmatprep.subr.mxu0 0.0
    %257 = vmatpush1.xpose.msra.mxu0 %v63
    %258 = vmatprep.subr.mxu0 0.0
    %259 = vmatpush1.xpose.msra.mxu0 %v62
    %260 = vmatprep.subr.mxu0 0.0
    %261 = vmatpush2.xpose.msra.mxu0 0.0
    %262 = vmatprep.subr.mxu0 0.0
    %263 = vmatpush2.xpose.msra.mxu0 0.0
    %264 = vmatprep.subr.mxu0 0.0
    %265 = vmatpush2.xpose.msra.mxu0 0.0
    %266 = vmatprep.subr.mxu0 0.0
    %267 = vmatpush2.xpose.msra.mxu0 0.0
    %268 = vmatprep.subr.mxu0 0.0
    %269 = vmatpush2.xpose.msra.mxu0 0.0
    %270 = vmatprep.subr.mxu0 0.0
    %271 = vmatpush2.xpose.msra.mxu0 0.0
    %272 = vmatprep.subr.mxu0 0.0
    %273 = vmatpush2.xpose.msra.mxu0 0.0
    %274 = vmatprep.subr.mxu0 0.0
    %275 = vmatpush2.xpose.msra.mxu0 0.0
    %276 = vmatprep.subr.mxu0 0.0
    %277 = vmatpush2.xpose.msra.mxu0 0.0
    %278 = vmatprep.subr.mxu0 0.0
    %279 = vmatpush2.xpose.msra.mxu0 0.0
    %280 = vmatprep.subr.mxu0 0.0
    %281 = vmatpush2.xpose.msra.mxu0 0.0
    %282 = vmatprep.subr.mxu0 0.0
    %283 = vmatpush2.xpose.msra.mxu0 0.0
    %284 = vmatprep.subr.mxu0 0.0
    %285 = vmatpush2.xpose.msra.mxu0 0.0
    %286 = vmatprep.subr.mxu0 0.0
    %287 = vmatpush2.xpose.msra.mxu0 %v80
    %288 = vmatprep.subr.mxu0 0.0
    %289 = vmatpush2.xpose.msra.mxu0 %v79
    %290 = vmatprep.subr.mxu0 0.0
    %291 = vmatpush2.xpose.msra.mxu0 %v78
    %292 = vmatprep.mubr.f32.mxu0 0.0
    %293 = vmatmul.mubr.f32.gmra.mxu0 %v153
    %v294 = vpop.f32.mrf.mxu0
    %v295 = vadd.f32 0.0, %v294
    %v296 = vpop.f32.mrf.mxu0
    %v297 = vadd.f32 0.0, %v296
    %298 = vdwg.mxu0
    %299 = vmatprep.subr.mxu0 0.0
    %300 = vmatpush1.xpose.msra.mxu0 %v96
    %301 = vmatprep.subr.mxu0 0.0
    %302 = vmatpush1.xpose.msra.mxu0 %v95
    %303 = vmatprep.subr.mxu0 0.0
    %304 = vmatpush1.xpose.msra.mxu0 %v94
    %305 = vmatprep.subr.mxu0 0.0
    %306 = vmatpush1.xpose.msra.mxu0 %v93
    %307 = vmatprep.subr.mxu0 0.0
    %308 = vmatpush1.xpose.msra.mxu0 %v92
    %309 = vmatprep.subr.mxu0 0.0
    %310 = vmatpush1.xpose.msra.mxu0 %v91
    %311 = vmatprep.subr.mxu0 0.0
    %312 = vmatpush1.xpose.msra.mxu0 %v90
    %313 = vmatprep.subr.mxu0 0.0
    %314 = vmatpush1.xpose.msra.mxu0 %v89
    %315 = vmatprep.subr.mxu0 0.0
    %316 = vmatpush1.xpose.msra.mxu0 %v88
    %317 = vmatprep.subr.mxu0 0.0
    %318 = vmatpush1.xpose.msra.mxu0 %v87
    %319 = vmatprep.subr.mxu0 0.0
    %320 = vmatpush1.xpose.msra.mxu0 %v86
    %321 = vmatprep.subr.mxu0 0.0
    %322 = vmatpush1.xpose.msra.mxu0 %v85
    %323 = vmatprep.subr.mxu0 0.0
    %324 = vmatpush1.xpose.msra.mxu0 %v84
    %325 = vmatprep.subr.mxu0 0.0
    %326 = vmatpush1.xpose.msra.mxu0 %v83
    %327 = vmatprep.subr.mxu0 0.0
    %328 = vmatpush1.xpose.msra.mxu0 %v82
    %329 = vmatprep.subr.mxu0 0.0
    %330 = vmatpush1.xpose.msra.mxu0 %v81
    %331 = vmatprep.subr.mxu0 0.0
    %332 = vmatpush2.xpose.msra.mxu0 0.0
    %333 = vmatprep.subr.mxu0 0.0
    %334 = vmatpush2.xpose.msra.mxu0 0.0
    %335 = vmatprep.subr.mxu0 0.0
    %336 = vmatpush2.xpose.msra.mxu0 0.0
    %337 = vmatprep.subr.mxu0 0.0
    %338 = vmatpush2.xpose.msra.mxu0 0.0
    %339 = vmatprep.subr.mxu0 0.0
    %340 = vmatpush2.xpose.msra.mxu0 0.0
    %341 = vmatprep.subr.mxu0 0.0
    %342 = vmatpush2.xpose.msra.mxu0 0.0
    %343 = vmatprep.subr.mxu0 0.0
    %344 = vmatpush2.xpose.msra.mxu0 0.0
    %345 = vmatprep.subr.mxu0 0.0
    %346 = vmatpush2.xpose.msra.mxu0 0.0
    %347 = vmatprep.subr.mxu0 0.0
    %348 = vmatpush2.xpose.msra.mxu0 0.0
    %349 = vmatprep.subr.mxu0 0.0
    %350 = vmatpush2.xpose.msra.mxu0 0.0
    %351 = vmatprep.subr.mxu0 0.0
    %352 = vmatpush2.xpose.msra.mxu0 0.0
    %353 = vmatprep.subr.mxu0 0.0
    %354 = vmatpush2.xpose.msra.mxu0 0.0
    %355 = vmatprep.subr.mxu0 0.0
    %356 = vmatpush2.xpose.msra.mxu0 0.0
    %357 = vmatprep.subr.mxu0 0.0
    %358 = vmatpush2.xpose.msra.mxu0 %v99
    %359 = vmatprep.subr.mxu0 0.0
    %360 = vmatpush2.xpose.msra.mxu0 %v98
    %361 = vmatprep.subr.mxu0 0.0
    %362 = vmatpush2.xpose.msra.mxu0 %v97
    %363 = vmatprep.mubr.f32.mxu0 0.0
    %364 = vmatmul.mubr.f32.gmra.mxu0 %v154
    %v365 = vpop.f32.mrf.mxu0
    %v366 = vadd.f32 0.0, %v365
    %v367 = vpop.f32.mrf.mxu0
    %v368 = vadd.f32 0.0, %v367
    %369 = vdwg.mxu0
    %370 = vmatprep.subr.mxu0 0.0
    %371 = vmatpush1.xpose.msra.mxu0 %v115
    %372 = vmatprep.subr.mxu0 0.0
    %373 = vmatpush1.xpose.msra.mxu0 %v114
    %374 = vmatprep.subr.mxu0 0.0
    %375 = vmatpush1.xpose.msra.mxu0 %v113
    %376 = vmatprep.subr.mxu0 0.0
    %377 = vmatpush1.xpose.msra.mxu0 %v112
    %378 = vmatprep.subr.mxu0 0.0
    %379 = vmatpush1.xpose.msra.mxu0 %v111
    %380 = vmatprep.subr.mxu0 0.0
    %381 = vmatpush1.xpose.msra.mxu0 %v110
    %382 = vmatprep.subr.mxu0 0.0
    %383 = vmatpush1.xpose.msra.mxu0 %v109
    %384 = vmatprep.subr.mxu0 0.0
    %385 = vmatpush1.xpose.msra.mxu0 %v108
    %386 = vmatprep.subr.mxu0 0.0
    %387 = vmatpush1.xpose.msra.mxu0 %v107
    %388 = vmatprep.subr.mxu0 0.0
    %389 = vmatpush1.xpose.msra.mxu0 %v106
    %390 = vmatprep.subr.mxu0 0.0
    %391 = vmatpush1.xpose.msra.mxu0 %v105
    %392 = vmatprep.subr.mxu0 0.0
    %393 = vmatpush1.xpose.msra.mxu0 %v104
    %394 = vmatprep.subr.mxu0 0.0
    %395 = vmatpush1.xpose.msra.mxu0 %v103
    %396 = vmatprep.subr.mxu0 0.0
    %397 = vmatpush1.xpose.msra.mxu0 %v102
    %398 = vmatprep.subr.mxu0 0.0
    %399 = vmatpush1.xpose.msra.mxu0 %v101
    %400 = vmatprep.subr.mxu0 0.0
    %401 = vmatpush1.xpose.msra.mxu0 %v100
    %402 = vmatprep.subr.mxu0 0.0
    %403 = vmatpush2.xpose.msra.mxu0 0.0
    %404 = vmatprep.subr.mxu0 0.0
    %405 = vmatpush2.xpose.msra.mxu0 0.0
    %406 = vmatprep.subr.mxu0 0.0
    %407 = vmatpush2.xpose.msra.mxu0 0.0
    %408 = vmatprep.subr.mxu0 0.0
    %409 = vmatpush2.xpose.msra.mxu0 0.0
    %410 = vmatprep.subr.mxu0 0.0
    %411 = vmatpush2.xpose.msra.mxu0 0.0
    %412 = vmatprep.subr.mxu0 0.0
    %413 = vmatpush2.xpose.msra.mxu0 0.0
    %414 = vmatprep.subr.mxu0 0.0
    %415 = vmatpush2.xpose.msra.mxu0 0.0
    %416 = vmatprep.subr.mxu0 0.0
    %417 = vmatpush2.xpose.msra.mxu0 0.0
    %418 = vmatprep.subr.mxu0 0.0
    %419 = vmatpush2.xpose.msra.mxu0 0.0
    %420 = vmatprep.subr.mxu0 0.0
    %421 = vmatpush2.xpose.msra.mxu0 0.0
    %422 = vmatprep.subr.mxu0 0.0
    %423 = vmatpush2.xpose.msra.mxu0 0.0
    %424 = vmatprep.subr.mxu0 0.0
    %425 = vmatpush2.xpose.msra.mxu0 0.0
    %426 = vmatprep.subr.mxu0 0.0
    %427 = vmatpush2.xpose.msra.mxu0 0.0
    %428 = vmatprep.subr.mxu0 0.0
    %429 = vmatpush2.xpose.msra.mxu0 %v118
    %430 = vmatprep.subr.mxu0 0.0
    %431 = vmatpush2.xpose.msra.mxu0 %v117
    %432 = vmatprep.subr.mxu0 0.0
    %433 = vmatpush2.xpose.msra.mxu0 %v116
    %434 = vmatprep.mubr.f32.mxu0 0.0
    %435 = vmatmul.mubr.f32.gmra.mxu0 %v155
    %v436 = vpop.f32.mrf.mxu0
    %v437 = vadd.f32 0.0, %v436
    %v438 = vpop.f32.mrf.mxu0
    %v439 = vadd.f32 0.0, %v438
    %440 = vdwg.mxu0
    %441 = vmatprep.subr.mxu0 0.0
    %442 = vmatpush1.xpose.msra.mxu0 %v134
    %443 = vmatprep.subr.mxu0 0.0
    %444 = vmatpush1.xpose.msra.mxu0 %v133
    %445 = vmatprep.subr.mxu0 0.0
    %446 = vmatpush1.xpose.msra.mxu0 %v132
    %447 = vmatprep.subr.mxu0 0.0
    %448 = vmatpush1.xpose.msra.mxu0 %v131
    %449 = vmatprep.subr.mxu0 0.0
    %450 = vmatpush1.xpose.msra.mxu0 %v130
    %451 = vmatprep.subr.mxu0 0.0
    %452 = vmatpush1.xpose.msra.mxu0 %v129
    %453 = vmatprep.subr.mxu0 0.0
    %454 = vmatpush1.xpose.msra.mxu0 %v128
    %455 = vmatprep.subr.mxu0 0.0
    %456 = vmatpush1.xpose.msra.mxu0 %v127
    %457 = vmatprep.subr.mxu0 0.0
    %458 = vmatpush1.xpose.msra.mxu0 %v126
    %459 = vmatprep.subr.mxu0 0.0
    %460 = vmatpush1.xpose.msra.mxu0 %v125
    %461 = vmatprep.subr.mxu0 0.0
    %462 = vmatpush1.xpose.msra.mxu0 %v124
    %463 = vmatprep.subr.mxu0 0.0
    %464 = vmatpush1.xpose.msra.mxu0 %v123
    %465 = vmatprep.subr.mxu0 0.0
    %466 = vmatpush1.xpose.msra.mxu0 %v122
    %467 = vmatprep.subr.mxu0 0.0
    %468 = vmatpush1.xpose.msra.mxu0 %v121
    %469 = vmatprep.subr.mxu0 0.0
    %470 = vmatpush1.xpose.msra.mxu0 %v120
    %471 = vmatprep.subr.mxu0 0.0
    %472 = vmatpush1.xpose.msra.mxu0 %v119
    %473 = vmatprep.subr.mxu0 0.0
    %474 = vmatpush2.xpose.msra.mxu0 0.0
    %475 = vmatprep.subr.mxu0 0.0
    %476 = vmatpush2.xpose.msra.mxu0 0.0
    %477 = vmatprep.subr.mxu0 0.0
    %478 = vmatpush2.xpose.msra.mxu0 0.0
    %479 = vmatprep.subr.mxu0 0.0
    %480 = vmatpush2.xpose.msra.mxu0 0.0
    %481 = vmatprep.subr.mxu0 0.0
    %482 = vmatpush2.xpose.msra.mxu0 0.0
    %483 = vmatprep.subr.mxu0 0.0
    %484 = vmatpush2.xpose.msra.mxu0 0.0
    %485 = vmatprep.subr.mxu0 0.0
    %486 = vmatpush2.xpose.msra.mxu0 0.0
    %487 = vmatprep.subr.mxu0 0.0
    %488 = vmatpush2.xpose.msra.mxu0 0.0
    %489 = vmatprep.subr.mxu0 0.0
    %490 = vmatpush2.xpose.msra.mxu0 0.0
    %491 = vmatprep.subr.mxu0 0.0
    %492 = vmatpush2.xpose.msra.mxu0 0.0
    %493 = vmatprep.subr.mxu0 0.0
    %494 = vmatpush2.xpose.msra.mxu0 0.0
    %495 = vmatprep.subr.mxu0 0.0
    %496 = vmatpush2.xpose.msra.mxu0 0.0
    %497 = vmatprep.subr.mxu0 0.0
    %498 = vmatpush2.xpose.msra.mxu0 0.0
    %499 = vmatprep.subr.mxu0 0.0
    %500 = vmatpush2.xpose.msra.mxu0 %v137
    %501 = vmatprep.subr.mxu0 0.0
    %502 = vmatpush2.xpose.msra.mxu0 %v136
    %503 = vmatprep.subr.mxu0 0.0
    %504 = vmatpush2.xpose.msra.mxu0 %v135
    %505 = vmatprep.mubr.f32.mxu0 0.0
    %506 = vmatmul.mubr.f32.gmra.mxu0 %v156
    %v507 = vpop.f32.mrf.mxu0
    %v508 = vadd.f32 0.0, %v507
    %v509 = vpop.f32.mrf.mxu0
    %v510 = vadd.f32 0.0, %v509
    %511 = vdwg.mxu0
    %vm512 = vcmask 1044480
    %v513 = vsel %vm512, %v224, -inf
    %vm514 = vcmask 176128
    %v515 = vsel %vm514, %v226, -inf
    %v516 = vmax.f32 %v513, %v515
    %517 = vmax.xlane.f32.xlu0 %v516
    %v518 = vpop.xlane.xlu0 %517
    %v519 = vsel %vm512, %v295, -inf
    %v520 = vsel %vm514, %v297, -inf
    %v521 = vmax.f32 %v519, %v520
    %522 = vmax.xlane.f32.xlu0 %v521
    %v523 = vpop.xlane.xlu0 %522
    %v524 = vsel %vm512, %v366, -inf
    %v525 = vsel %vm514, %v368, -inf
    %v526 = vmax.f32 %v524, %v525
    %527 = vmax.xlane.f32.xlu0 %v526
    %v528 = vpop.xlane.xlu0 %527
    %v529 = vsel %vm512, %v437, -inf
    %v530 = vsel %vm514, %v439, -inf
    %v531 = vmax.f32 %v529, %v530
    %532 = vmax.xlane.f32.xlu0 %v531
    %v533 = vpop.xlane.xlu0 %532
    %v534 = vsel %vm512, %v508, -inf
    %v535 = vsel %vm514, %v510, -inf
    %v536 = vmax.f32 %v534, %v535
    %537 = vmax.xlane.f32.xlu0 %v536
    %v538 = vpop.xlane.xlu0 %537
    %v539 = vsub.f32 %v224, %v518
    %v540 = vsub.f32 %v226, %v518
    %v541 = vsub.f32 %v295, %v523
    %v542 = vsub.f32 %v297, %v523
    %v543 = vsub.f32 %v366, %v528
    %v544 = vsub.f32 %v368, %v528
    %v545 = vsub.f32 %v437, %v533
    %v546 = vsub.f32 %v439, %v533
    %v547 = vsub.f32 %v508, %v538
    %v548 = vsub.f32 %v510, %v538
    %v549 = vmul.f32 %v539, 1.442695
    %v550 = vpow.pop %v549
    %v551 = vmul.f32 %v540, 1.442695
    %v552 = vpow.pop %v551
    %v553 = vmul.f32 %v541, 1.442695
    %v554 = vpow.pop %v553
    %v555 = vmul.f32 %v542, 1.442695
    %v556 = vpow.pop %v555
    %v557 = vmul.f32 %v543, 1.442695
    %v558 = vpow.pop %v557
    %v559 = vmul.f32 %v544, 1.442695
    %v560 = vpow.pop %v559
    %v561 = vmul.f32 %v545, 1.442695
    %v562 = vpow.pop %v561
    %v563 = vmul.f32 %v546, 1.442695
    %v564 = vpow.pop %v563
    %v565 = vmul.f32 %v547, 1.442695
    %v566 = vpow.pop %v565
    %v567 = vmul.f32 %v548, 1.442695
    %v568 = vpow.pop %v567
    %v569 = vsel %vm512, %v550, 0.0
    %v570 = vsel %vm514, %v552, 0.0
    %v571 = vadd.f32 %v569, %v570
    %572 = vadd.xlane.f32.xlu0 %v571
    %v573 = vpop.xlane.xlu0 %572
    %v574 = vsel %vm512, %v554, 0.0
    %v575 = vsel %vm514, %v556, 0.0
    %v576 = vadd.f32 %v574, %v575
    %577 = vadd.xlane.f32.xlu0 %v576
    %v578 = vpop.xlane.xlu0 %577
    %v579 = vsel %vm512, %v558, 0.0
    %v580 = vsel %vm514, %v560, 0.0
    %v581 = vadd.f32 %v579, %v580
    %582 = vadd.xlane.f32.xlu0 %v581
    %v583 = vpop.xlane.xlu0 %582
    %v584 = vsel %vm512, %v562, 0.0
    %v585 = vsel %vm514, %v564, 0.0
    %v586 = vadd.f32 %v584, %v585
    %587 = vadd.xlane.f32.xlu0 %v586
    %v588 = vpop.xlane.xlu0 %587
    %v589 = vsel %vm512, %v566, 0.0
    %v590 = vsel %vm514, %v568, 0.0
    %v591 = vadd.f32 %v589, %v590
    %592 = vadd.xlane.f32.xlu0 %v591
    %v593 = vpop.xlane.xlu0 %592
    %v594 = vrcp.pop %v573
    %v595 = vrcp.pop %v578
    %v596 = vrcp.pop %v583
    %v597 = vrcp.pop %v588
    %v598 = vrcp.pop %v593
    %v599 = vmul.f32 %v550, %v594
    %v600 = vmul.f32 %v552, %v594
    %v601 = vmul.f32 %v554, %v595
    %v602 = vmul.f32 %v556, %v595
    %v603 = vmul.f32 %v558, %v596
    %v604 = vmul.f32 %v560, %v596
    %v605 = vmul.f32 %v562, %v597
    %v606 = vmul.f32 %v564, %v597
    %v607 = vmul.f32 %v566, %v598
    %v608 = vmul.f32 %v568, %v598
    %vm609 = vcmask 179200
    %v611 = vsel %vm609, %v600, 0
    %vm613 = vcmask 1045504
    %v615 = vsel %vm613, %v61, 0
    %617 = vmatprep.subr.mxu0 0.0
    %618 = vmatpush1.msra.mxu0 %v58
    %619 = vmatprep.subr.mxu0 0.0
    %620 = vmatpush1.msra.mxu0 %v57
    %621 = vmatprep.subr.mxu0 0.0
    %622 = vmatpush1.msra.mxu0 %v56
    %623 = vmatprep.subr.mxu0 0.0
    %624 = vmatpush1.msra.mxu0 %v55
    %625 = vmatprep.subr.mxu0 0.0
    %626 = vmatpush1.msra.mxu0 %v54
    %627 = vmatprep.subr.mxu0 0.0
    %628 = vmatpush1.msra.mxu0 %v53
    %629 = vmatprep.subr.mxu0 0.0
    %630 = vmatpush1.msra.mxu0 %v52
    %631 = vmatprep.subr.mxu0 0.0
    %632 = vmatpush1.msra.mxu0 %v51
    %633 = vmatprep.subr.mxu0 0.0
    %634 = vmatpush1.msra.mxu0 %v50
    %635 = vmatprep.subr.mxu0 0.0
    %636 = vmatpush1.msra.mxu0 %v49
    %637 = vmatprep.subr.mxu0 0.0
    %638 = vmatpush1.msra.mxu0 %v48
    %639 = vmatprep.subr.mxu0 0.0
    %640 = vmatpush1.msra.mxu0 %v47
    %641 = vmatprep.subr.mxu0 0.0
    %642 = vmatpush1.msra.mxu0 %v46
    %643 = vmatprep.subr.mxu0 0.0
    %644 = vmatpush1.msra.mxu0 %v45
    %645 = vmatprep.subr.mxu0 0.0
    %646 = vmatpush1.msra.mxu0 %v44
    %647 = vmatprep.subr.mxu0 0.0
    %648 = vmatpush1.msra.mxu0 %v43
    %649 = vmatprep.subr.mxu0 0.0
    %650 = vmatpush2.msra.mxu0 0.0
    %651 = vmatprep.subr.mxu0 0.0
    %652 = vmatpush2.msra.mxu0 0.0
    %653 = vmatprep.subr.mxu0 0.0
    %654 = vmatpush2.msra.mxu0 0.0
    %655 = vmatprep.subr.mxu0 0.0
    %656 = vmatpush2.msra.mxu0 0.0
    %657 = vmatprep.subr.mxu0 0.0
    %658 = vmatpush2.msra.mxu0 0.0
    %659 = vmatprep.subr.mxu0 0.0
    %660 = vmatpush2.msra.mxu0 0.0
    %661 = vmatprep.subr.mxu0 0.0
    %662 = vmatpush2.msra.mxu0 0.0
    %663 = vmatprep.subr.mxu0 0.0
    %664 = vmatpush2.msra.mxu0 0.0
    %665 = vmatprep.subr.mxu0 0.0
    %666 = vmatpush2.msra.mxu0 0.0
    %667 = vmatprep.subr.mxu0 0.0
    %668 = vmatpush2.msra.mxu0 0.0
    %669 = vmatprep.subr.mxu0 0.0
    %670 = vmatpush2.msra.mxu0 0.0
    %671 = vmatprep.subr.mxu0 0.0
    %672 = vmatpush2.msra.mxu0 0.0
    %673 = vmatprep.subr.mxu0 0.0
    %674 = vmatpush2.msra.mxu0 0.0
    %675 = vmatprep.subr.mxu0 0.0
    %676 = vmatpush2.msra.mxu0 %v615
    %677 = vmatprep.subr.mxu0 0.0
    %678 = vmatpush2.msra.mxu0 %v60
    %679 = vmatprep.subr.mxu0 0.0
    %680 = vmatpush2.msra.mxu0 %v59
    %681 = vmatprep.mubr.f32.mxu0 %v611
    %682 = vmatmul.mubr.f32.gmra.mxu0 %v599
    %v683 = vpop.f32.mrf.mxu0
    %v684 = vadd.f32 0.0, %v683
    %v685 = vpop.f32.mrf.mxu0
    %686 = vdwg.mxu0
    %v688 = vsel %vm609, %v602, 0
    %v691 = vsel %vm613, %v80, 0
    %693 = vmatprep.subr.mxu0 0.0
    %694 = vmatpush1.msra.mxu0 %v77
    %695 = vmatprep.subr.mxu0 0.0
    %696 = vmatpush1.msra.mxu0 %v76
    %697 = vmatprep.subr.mxu0 0.0
    %698 = vmatpush1.msra.mxu0 %v75
    %699 = vmatprep.subr.mxu0 0.0
    %700 = vmatpush1.msra.mxu0 %v74
    %701 = vmatprep.subr.mxu0 0.0
    %702 = vmatpush1.msra.mxu0 %v73
    %703 = vmatprep.subr.mxu0 0.0
    %704 = vmatpush1.msra.mxu0 %v72
    %705 = vmatprep.subr.mxu0 0.0
    %706 = vmatpush1.msra.mxu0 %v71
    %707 = vmatprep.subr.mxu0 0.0
    %708 = vmatpush1.msra.mxu0 %v70
    %709 = vmatprep.subr.mxu0 0.0
    %710 = vmatpush1.msra.mxu0 %v69
    %711 = vmatprep.subr.mxu0 0.0
    %712 = vmatpush1.msra.mxu0 %v68
    %713 = vmatprep.subr.mxu0 0.0
    %714 = vmatpush1.msra.mxu0 %v67
    %715 = vmatprep.subr.mxu0 0.0
    %716 = vmatpush1.msra.mxu0 %v66
    %717 = vmatprep.subr.mxu0 0.0
    %718 = vmatpush1.msra.mxu0 %v65
    %719 = vmatprep.subr.mxu0 0.0
    %720 = vmatpush1.msra.mxu0 %v64
    %721 = vmatprep.subr.mxu0 0.0
    %722 = vmatpush1.msra.mxu0 %v63
    %723 = vmatprep.subr.mxu0 0.0
    %724 = vmatpush1.msra.mxu0 %v62
    %725 = vmatprep.subr.mxu0 0.0
    %726 = vmatpush2.msra.mxu0 0.0
    %727 = vmatprep.subr.mxu0 0.0
    %728 = vmatpush2.msra.mxu0 0.0
    %729 = vmatprep.subr.mxu0 0.0
    %730 = vmatpush2.msra.mxu0 0.0
    %731 = vmatprep.subr.mxu0 0.0
    %732 = vmatpush2.msra.mxu0 0.0
    %733 = vmatprep.subr.mxu0 0.0
    %734 = vmatpush2.msra.mxu0 0.0
    %735 = vmatprep.subr.mxu0 0.0
    %736 = vmatpush2.msra.mxu0 0.0
    %737 = vmatprep.subr.mxu0 0.0
    %738 = vmatpush2.msra.mxu0 0.0
    %739 = vmatprep.subr.mxu0 0.0
    %740 = vmatpush2.msra.mxu0 0.0
    %741 = vmatprep.subr.mxu0 0.0
    %742 = vmatpush2.msra.mxu0 0.0
    %743 = vmatprep.subr.mxu0 0.0
    %744 = vmatpush2.msra.mxu0 0.0
    %745 = vmatprep.subr.mxu0 0.0
    %746 = vmatpush2.msra.mxu0 0.0
    %747 = vmatprep.subr.mxu0 0.0
    %748 = vmatpush2.msra.mxu0 0.0
    %749 = vmatprep.subr.mxu0 0.0
    %750 = vmatpush2.msra.mxu0 0.0
    %751 = vmatprep.subr.mxu0 0.0
    %752 = vmatpush2.msra.mxu0 %v691
    %753 = vmatprep.subr.mxu0 0.0
    %754 = vmatpush2.msra.mxu0 %v79
    %755 = vmatprep.subr.mxu0 0.0
    %756 = vmatpush2.msra.mxu0 %v78
    %757 = vmatprep.mubr.f32.mxu0 %v688
    %758 = vmatmul.mubr.f32.gmra.mxu0 %v601
    %v759 = vpop.f32.mrf.mxu0
    %v760 = vadd.f32 0.0, %v759
    %v761 = vpop.f32.mrf.mxu0
    %762 = vdwg.mxu0
    %v764 = vsel %vm609, %v604, 0
    %v767 = vsel %vm613, %v99, 0
    %769 = vmatprep.subr.mxu0 0.0
    %770 = vmatpush1.msra.mxu0 %v96
    %771 = vmatprep.subr.mxu0 0.0
    %772 = vmatpush1.msra.mxu0 %v95
    %773 = vmatprep.subr.mxu0 0.0
    %774 = vmatpush1.msra.mxu0 %v94
    %775 = vmatprep.subr.mxu0 0.0
    %776 = vmatpush1.msra.mxu0 %v93
    %777 = vmatprep.subr.mxu0 0.0
    %778 = vmatpush1.msra.mxu0 %v92
    %779 = vmatprep.subr.mxu0 0.0
    %780 = vmatpush1.msra.mxu0 %v91
    %781 = vmatprep.subr.mxu0 0.0
    %782 = vmatpush1.msra.mxu0 %v90
    %783 = vmatprep.subr.mxu0 0.0
    %784 = vmatpush1.msra.mxu0 %v89
    %785 = vmatprep.subr.mxu0 0.0
    %786 = vmatpush1.msra.mxu0 %v88
    %787 = vmatprep.subr.mxu0 0.0
    %788 = vmatpush1.msra.mxu0 %v87
    %789 = vmatprep.subr.mxu0 0.0
    %790 = vmatpush1.msra.mxu0 %v86
    %791 = vmatprep.subr.mxu0 0.0
    %792 = vmatpush1.msra.mxu0 %v85
    %793 = vmatprep.subr.mxu0 0.0
    %794 = vmatpush1.msra.mxu0 %v84
    %795 = vmatprep.subr.mxu0 0.0
    %796 = vmatpush1.msra.mxu0 %v83
    %797 = vmatprep.subr.mxu0 0.0
    %798 = vmatpush1.msra.mxu0 %v82
    %799 = vmatprep.subr.mxu0 0.0
    %800 = vmatpush1.msra.mxu0 %v81
    %801 = vmatprep.subr.mxu0 0.0
    %802 = vmatpush2.msra.mxu0 0.0
    %803 = vmatprep.subr.mxu0 0.0
    %804 = vmatpush2.msra.mxu0 0.0
    %805 = vmatprep.subr.mxu0 0.0
    %806 = vmatpush2.msra.mxu0 0.0
    %807 = vmatprep.subr.mxu0 0.0
    %808 = vmatpush2.msra.mxu0 0.0
    %809 = vmatprep.subr.mxu0 0.0
    %810 = vmatpush2.msra.mxu0 0.0
    %811 = vmatprep.subr.mxu0 0.0
    %812 = vmatpush2.msra.mxu0 0.0
    %813 = vmatprep.subr.mxu0 0.0
    %814 = vmatpush2.msra.mxu0 0.0
    %815 = vmatprep.subr.mxu0 0.0
    %816 = vmatpush2.msra.mxu0 0.0
    %817 = vmatprep.subr.mxu0 0.0
    %818 = vmatpush2.msra.mxu0 0.0
    %819 = vmatprep.subr.mxu0 0.0
    %820 = vmatpush2.msra.mxu0 0.0
    %821 = vmatprep.subr.mxu0 0.0
    %822 = vmatpush2.msra.mxu0 0.0
    %823 = vmatprep.subr.mxu0 0.0
    %824 = vmatpush2.msra.mxu0 0.0
    %825 = vmatprep.subr.mxu0 0.0
    %826 = vmatpush2.msra.mxu0 0.0
    %827 = vmatprep.subr.mxu0 0.0
    %828 = vmatpush2.msra.mxu0 %v767
    %829 = vmatprep.subr.mxu0 0.0
    %830 = vmatpush2.msra.mxu0 %v98
    %831 = vmatprep.subr.mxu0 0.0
    %832 = vmatpush2.msra.mxu0 %v97
    %833 = vmatprep.mubr.f32.mxu0 %v764
    %834 = vmatmul.mubr.f32.gmra.mxu0 %v603
    %v835 = vpop.f32.mrf.mxu0
    %v836 = vadd.f32 0.0, %v835
    %v837 = vpop.f32.mrf.mxu0
    %838 = vdwg.mxu0
    %v840 = vsel %vm609, %v606, 0
    %v843 = vsel %vm613, %v118, 0
    %845 = vmatprep.subr.mxu0 0.0
    %846 = vmatpush1.msra.mxu0 %v115
    %847 = vmatprep.subr.mxu0 0.0
    %848 = vmatpush1.msra.mxu0 %v114
    %849 = vmatprep.subr.mxu0 0.0
    %850 = vmatpush1.msra.mxu0 %v113
    %851 = vmatprep.subr.mxu0 0.0
    %852 = vmatpush1.msra.mxu0 %v112
    %853 = vmatprep.subr.mxu0 0.0
    %854 = vmatpush1.msra.mxu0 %v111
    %855 = vmatprep.subr.mxu0 0.0
    %856 = vmatpush1.msra.mxu0 %v110
    %857 = vmatprep.subr.mxu0 0.0
    %858 = vmatpush1.msra.mxu0 %v109
    %859 = vmatprep.subr.mxu0 0.0
    %860 = vmatpush1.msra.mxu0 %v108
    %861 = vmatprep.subr.mxu0 0.0
    %862 = vmatpush1.msra.mxu0 %v107
    %863 = vmatprep.subr.mxu0 0.0
    %864 = vmatpush1.msra.mxu0 %v106
    %865 = vmatprep.subr.mxu0 0.0
    %866 = vmatpush1.msra.mxu0 %v105
    %867 = vmatprep.subr.mxu0 0.0
    %868 = vmatpush1.msra.mxu0 %v104
    %869 = vmatprep.subr.mxu0 0.0
    %870 = vmatpush1.msra.mxu0 %v103
    %871 = vmatprep.subr.mxu0 0.0
    %872 = vmatpush1.msra.mxu0 %v102
    %873 = vmatprep.subr.mxu0 0.0
    %874 = vmatpush1.msra.mxu0 %v101
    %875 = vmatprep.subr.mxu0 0.0
    %876 = vmatpush1.msra.mxu0 %v100
    %877 = vmatprep.subr.mxu0 0.0
    %878 = vmatpush2.msra.mxu0 0.0
    %879 = vmatprep.subr.mxu0 0.0
    %880 = vmatpush2.msra.mxu0 0.0
    %881 = vmatprep.subr.mxu0 0.0
    %882 = vmatpush2.msra.mxu0 0.0
    %883 = vmatprep.subr.mxu0 0.0
    %884 = vmatpush2.msra.mxu0 0.0
    %885 = vmatprep.subr.mxu0 0.0
    %886 = vmatpush2.msra.mxu0 0.0
    %887 = vmatprep.subr.mxu0 0.0
    %888 = vmatpush2.msra.mxu0 0.0
    %889 = vmatprep.subr.mxu0 0.0
    %890 = vmatpush2.msra.mxu0 0.0
    %891 = vmatprep.subr.mxu0 0.0
    %892 = vmatpush2.msra.mxu0 0.0
    %893 = vmatprep.subr.mxu0 0.0
    %894 = vmatpush2.msra.mxu0 0.0
    %895 = vmatprep.subr.mxu0 0.0
    %896 = vmatpush2.msra.mxu0 0.0
    %897 = vmatprep.subr.mxu0 0.0
    %898 = vmatpush2.msra.mxu0 0.0
    %899 = vmatprep.subr.mxu0 0.0
    %900 = vmatpush2.msra.mxu0 0.0
    %901 = vmatprep.subr.mxu0 0.0
    %902 = vmatpush2.msra.mxu0 0.0
    %903 = vmatprep.subr.mxu0 0.0
    %904 = vmatpush2.msra.mxu0 %v843
    %905 = vmatprep.subr.mxu0 0.0
    %906 = vmatpush2.msra.mxu0 %v117
    %907 = vmatprep.subr.mxu0 0.0
    %908 = vmatpush2.msra.mxu0 %v116
    %909 = vmatprep.mubr.f32.mxu0 %v840
    %910 = vmatmul.mubr.f32.gmra.mxu0 %v605
    %v911 = vpop.f32.mrf.mxu0
    %v912 = vadd.f32 0.0, %v911
    %v913 = vpop.f32.mrf.mxu0
    %914 = vdwg.mxu0
    %v916 = vsel %vm609, %v608, 0
    %v919 = vsel %vm613, %v137, 0
    %921 = vmatprep.subr.mxu0 0.0
    %922 = vmatpush1.msra.mxu0 %v134
    %923 = vmatprep.subr.mxu0 0.0
    %924 = vmatpush1.msra.mxu0 %v133
    %925 = vmatprep.subr.mxu0 0.0
    %926 = vmatpush1.msra.mxu0 %v132
    %927 = vmatprep.subr.mxu0 0.0
    %928 = vmatpush1.msra.mxu0 %v131
    %929 = vmatprep.subr.mxu0 0.0
    %930 = vmatpush1.msra.mxu0 %v130
    %931 = vmatprep.subr.mxu0 0.0
    %932 = vmatpush1.msra.mxu0 %v129
    %933 = vmatprep.subr.mxu0 0.0
    %934 = vmatpush1.msra.mxu0 %v128
    %935 = vmatprep.subr.mxu0 0.0
    %936 = vmatpush1.msra.mxu0 %v127
    %937 = vmatprep.subr.mxu0 0.0
    %938 = vmatpush1.msra.mxu0 %v126
    %939 = vmatprep.subr.mxu0 0.0
    %940 = vmatpush1.msra.mxu0 %v125
    %941 = vmatprep.subr.mxu0 0.0
    %942 = vmatpush1.msra.mxu0 %v124
    %943 = vmatprep.subr.mxu0 0.0
    %944 = vmatpush1.msra.mxu0 %v123
    %945 = vmatprep.subr.mxu0 0.0
    %946 = vmatpush1.msra.mxu0 %v122
    %947 = vmatprep.subr.mxu0 0.0
    %948 = vmatpush1.msra.mxu0 %v121
    %949 = vmatprep.subr.mxu0 0.0
    %950 = vmatpush1.msra.mxu0 %v120
    %951 = vmatprep.subr.mxu0 0.0
    %952 = vmatpush1.msra.mxu0 %v119
    %953 = vmatprep.subr.mxu0 0.0
    %954 = vmatpush2.msra.mxu0 0.0
    %955 = vmatprep.subr.mxu0 0.0
    %956 = vmatpush2.msra.mxu0 0.0
    %957 = vmatprep.subr.mxu0 0.0
    %958 = vmatpush2.msra.mxu0 0.0
    %959 = vmatprep.subr.mxu0 0.0
    %960 = vmatpush2.msra.mxu0 0.0
    %961 = vmatprep.subr.mxu0 0.0
    %962 = vmatpush2.msra.mxu0 0.0
    %963 = vmatprep.subr.mxu0 0.0
    %964 = vmatpush2.msra.mxu0 0.0
    %965 = vmatprep.subr.mxu0 0.0
    %966 = vmatpush2.msra.mxu0 0.0
    %967 = vmatprep.subr.mxu0 0.0
    %968 = vmatpush2.msra.mxu0 0.0
    %969 = vmatprep.subr.mxu0 0.0
    %970 = vmatpush2.msra.mxu0 0.0
    %971 = vmatprep.subr.mxu0 0.0
    %972 = vmatpush2.msra.mxu0 0.0
    %973 = vmatprep.subr.mxu0 0.0
    %974 = vmatpush2.msra.mxu0 0.0
    %975 = vmatprep.subr.mxu0 0.0
    %976 = vmatpush2.msra.mxu0 0.0
    %977 = vmatprep.subr.mxu0 0.0
    %978 = vmatpush2.msra.mxu0 0.0
    %979 = vmatprep.subr.mxu0 0.0
    %980 = vmatpush2.msra.mxu0 %v919
    %981 = vmatprep.subr.mxu0 0.0
    %982 = vmatpush2.msra.mxu0 %v136
    %983 = vmatprep.subr.mxu0 0.0
    %984 = vmatpush2.msra.mxu0 %v135
    %985 = vmatprep.mubr.f32.mxu0 %v916
    %986 = vmatmul.mubr.f32.gmra.mxu0 %v607
    %v987 = vpop.f32.mrf.mxu0
    %v988 = vadd.f32 0.0, %v987
    %v989 = vpop.f32.mrf.mxu0
    %990 = vdwg.mxu0
    %992 = vset.pattern.permute.xlu0 0
    %993 = vperm.xlu0 %992, %v148
    %v994 = vpop.permute.xlu0 %993
    %v996 = vmul.f32 %v684, %v994
    %v997 = vmul.f32 %v760, %v994
    %v998 = vmul.f32 %v836, %v994
    %v999 = vmul.f32 %v912, %v994
    %v1000 = vmul.f32 %v988, %v994
    %1002 = vset.pattern.permute.xlu0 0
    %1003 = vperm.xlu0 %1002, %v149
    %v1004 = vpop.permute.xlu0 %1003
    %v1006 = vadd.f32 %v996, %v1004
    %v1007 = vadd.f32 %v997, %v1004
    %v1008 = vadd.f32 %v998, %v1004
    %v1009 = vadd.f32 %v999, %v1004
    %v1010 = vadd.f32 %v1000, %v1004
    %v1011 = vmul.f32 %v1006, %v1006
    %v1012 = vmul.f32 %v1007, %v1007
    %v1013 = vmul.f32 %v1008, %v1008
    %v1014 = vmul.f32 %v1009, %v1009
    %v1015 = vmul.f32 %v1010, %v1010
    %v1016 = vsel %vm512, %v1011, 0.0
    %1017 = vadd.xlane.f32.xlu0 %v1016
    %v1018 = vpop.xlane.xlu0 %1017
    %v1019 = vsel %vm512, %v1012, 0.0
    %1020 = vadd.xlane.f32.xlu0 %v1019
    %v1021 = vpop.xlane.xlu0 %1020
    %v1022 = vsel %vm512, %v1013, 0.0
    %1023 = vadd.xlane.f32.xlu0 %v1022
    %v1024 = vpop.xlane.xlu0 %1023
    %v1025 = vsel %vm512, %v1014, 0.0
    %1026 = vadd.xlane.f32.xlu0 %v1025
    %v1027 = vpop.xlane.xlu0 %1026
    %v1028 = vsel %vm512, %v1015, 0.0
    %1029 = vadd.xlane.f32.xlu0 %v1028
    %v1030 = vpop.xlane.xlu0 %1029
    %v1031 = vrsqrt.pop %v1018
    %v1032 = vrsqrt.pop %v1021
    %v1033 = vrsqrt.pop %v1024
    %v1034 = vrsqrt.pop %v1027
    %v1035 = vrsqrt.pop %v1030
    %v1036 = vmul.f32 %v1031, 0.4472136
    %v1037 = vmul.f32 %v1032, 0.4472136
    %v1038 = vmul.f32 %v1033, 0.4472136
    %v1039 = vmul.f32 %v1034, 0.4472136
    %v1040 = vmul.f32 %v1035, 0.4472136
    %v1041 = vmul.f32 %v1006, %v1036
    %v1042 = vmul.f32 %v1007, %v1037
    %v1043 = vmul.f32 %v1008, %v1038
    %v1044 = vmul.f32 %v1009, %v1039
    %v1045 = vmul.f32 %v1010, %v1040
    %v1046 = vld [vmem:[%s2] sm:$0x1f]
    %v1047 = vld [vmem:[%s2 + $0x8] sm:$0x1f]
    %v1048 = vld [vmem:[%s2 + $0x10] sm:$0x1f]
    %v1049 = vld [vmem:[%s2 + $0x18] sm:$0x1f]
    %v1050 = vld [vmem:[%s2 + $0x20] sm:$0x1f]
    %1051 = vmatprep.subr.mxu0 0.0
    %1052 = vmatpush1.xpose.msra.mxu0 0.0
    %1053 = vmatprep.subr.mxu0 0.0
    %1054 = vmatpush1.xpose.msra.mxu0 0.0
    %1055 = vmatprep.subr.mxu0 0.0
    %1056 = vmatpush1.xpose.msra.mxu0 0.0
    %1057 = vmatprep.subr.mxu0 0.0
    %1058 = vmatpush1.xpose.msra.mxu0 0.0
    %1059 = vmatprep.subr.mxu0 0.0
    %1060 = vmatpush1.xpose.msra.mxu0 0.0
    %1061 = vmatprep.subr.mxu0 0.0
    %1062 = vmatpush1.xpose.msra.mxu0 0.0
    %1063 = vmatprep.subr.mxu0 0.0
    %1064 = vmatpush1.xpose.msra.mxu0 0.0
    %1065 = vmatprep.subr.mxu0 0.0
    %1066 = vmatpush1.xpose.msra.mxu0 0.0
    %1067 = vmatprep.subr.mxu0 0.0
    %1068 = vmatpush1.xpose.msra.mxu0 0.0
    %1069 = vmatprep.subr.mxu0 0.0
    %1070 = vmatpush1.xpose.msra.mxu0 0.0
    %1071 = vmatprep.subr.mxu0 0.0
    %1072 = vmatpush1.xpose.msra.mxu0 0.0
    %1073 = vmatprep.subr.mxu0 0.0
    %1074 = vmatpush1.xpose.msra.mxu0 0.0
    %1075 = vmatprep.subr.mxu0 0.0
    %1076 = vmatpush1.xpose.msra.mxu0 0.0
    %1077 = vmatprep.subr.mxu0 0.0
    %1078 = vmatpush1.xpose.msra.mxu0 0.0
    %1079 = vmatprep.subr.mxu0 0.0
    %1080 = vmatpush1.xpose.msra.mxu0 %v139
    %1081 = vmatprep.subr.mxu0 0.0
    %1082 = vmatpush1.xpose.msra.mxu0 %v138
    %1083 = vmatprep.subr.mxu0 0.0
    %1084 = vmatpush2.xpose.msra.mxu0 0.0
    %1085 = vmatprep.subr.mxu0 0.0
    %1086 = vmatpush2.xpose.msra.mxu0 0.0
    %1087 = vmatprep.subr.mxu0 0.0
    %1088 = vmatpush2.xpose.msra.mxu0 0.0
    %1089 = vmatprep.subr.mxu0 0.0
    %1090 = vmatpush2.xpose.msra.mxu0 0.0
    %1091 = vmatprep.subr.mxu0 0.0
    %1092 = vmatpush2.xpose.msra.mxu0 0.0
    %1093 = vmatprep.subr.mxu0 0.0
    %1094 = vmatpush2.xpose.msra.mxu0 0.0
    %1095 = vmatprep.subr.mxu0 0.0
    %1096 = vmatpush2.xpose.msra.mxu0 0.0
    %1097 = vmatprep.subr.mxu0 0.0
    %1098 = vmatpush2.xpose.msra.mxu0 0.0
    %1099 = vmatprep.subr.mxu0 0.0
    %1100 = vmatpush2.xpose.msra.mxu0 0.0
    %1101 = vmatprep.subr.mxu0 0.0
    %1102 = vmatpush2.xpose.msra.mxu0 0.0
    %1103 = vmatprep.subr.mxu0 0.0
    %1104 = vmatpush2.xpose.msra.mxu0 0.0
    %1105 = vmatprep.subr.mxu0 0.0
    %1106 = vmatpush2.xpose.msra.mxu0 0.0
    %1107 = vmatprep.subr.mxu0 0.0
    %1108 = vmatpush2.xpose.msra.mxu0 0.0
    %1109 = vmatprep.subr.mxu0 0.0
    %1110 = vmatpush2.xpose.msra.mxu0 0.0
    %1111 = vmatprep.subr.mxu0 0.0
    %1112 = vmatpush2.xpose.msra.mxu0 0.0
    %1113 = vmatprep.subr.mxu0 0.0
    %1114 = vmatpush2.xpose.msra.mxu0 0.0
    %1115 = vmatprep.mubr.f32.mxu0 0.0
    %1116 = vmatmul.mubr.f32.gmra.mxu0 %v1046
    %v1117 = vpop.f32.mrf.mxu0
    %v1118 = vadd.f32 0.0, %v1117
    %v1119 = vpop.f32.mrf.mxu0
    %1120 = vdwg.mxu0
    %1121 = vmatprep.subr.mxu0 0.0
    %1122 = vmatpush1.xpose.msra.mxu0 0.0
    %1123 = vmatprep.subr.mxu0 0.0
    %1124 = vmatpush1.xpose.msra.mxu0 0.0
    %1125 = vmatprep.subr.mxu0 0.0
    %1126 = vmatpush1.xpose.msra.mxu0 0.0
    %1127 = vmatprep.subr.mxu0 0.0
    %1128 = vmatpush1.xpose.msra.mxu0 0.0
    %1129 = vmatprep.subr.mxu0 0.0
    %1130 = vmatpush1.xpose.msra.mxu0 0.0
    %1131 = vmatprep.subr.mxu0 0.0
    %1132 = vmatpush1.xpose.msra.mxu0 0.0
    %1133 = vmatprep.subr.mxu0 0.0
    %1134 = vmatpush1.xpose.msra.mxu0 0.0
    %1135 = vmatprep.subr.mxu0 0.0
    %1136 = vmatpush1.xpose.msra.mxu0 0.0
    %1137 = vmatprep.subr.mxu0 0.0
    %1138 = vmatpush1.xpose.msra.mxu0 0.0
    %1139 = vmatprep.subr.mxu0 0.0
    %1140 = vmatpush1.xpose.msra.mxu0 0.0
    %1141 = vmatprep.subr.mxu0 0.0
    %1142 = vmatpush1.xpose.msra.mxu0 0.0
    %1143 = vmatprep.subr.mxu0 0.0
    %1144 = vmatpush1.xpose.msra.mxu0 0.0
    %1145 = vmatprep.subr.mxu0 0.0
    %1146 = vmatpush1.xpose.msra.mxu0 0.0
    %1147 = vmatprep.subr.mxu0 0.0
    %1148 = vmatpush1.xpose.msra.mxu0 0.0
    %1149 = vmatprep.subr.mxu0 0.0
    %1150 = vmatpush1.xpose.msra.mxu0 %v141
    %1151 = vmatprep.subr.mxu0 0.0
    %1152 = vmatpush1.xpose.msra.mxu0 %v140
    %1153 = vmatprep.subr.mxu0 0.0
    %1154 = vmatpush2.xpose.msra.mxu0 0.0
    %1155 = vmatprep.subr.mxu0 0.0
    %1156 = vmatpush2.xpose.msra.mxu0 0.0
    %1157 = vmatprep.subr.mxu0 0.0
    %1158 = vmatpush2.xpose.msra.mxu0 0.0
    %1159 = vmatprep.subr.mxu0 0.0
    %1160 = vmatpush2.xpose.msra.mxu0 0.0
    %1161 = vmatprep.subr.mxu0 0.0
    %1162 = vmatpush2.xpose.msra.mxu0 0.0
    %1163 = vmatprep.subr.mxu0 0.0
    %1164 = vmatpush2.xpose.msra.mxu0 0.0
    %1165 = vmatprep.subr.mxu0 0.0
    %1166 = vmatpush2.xpose.msra.mxu0 0.0
    %1167 = vmatprep.subr.mxu0 0.0
    %1168 = vmatpush2.xpose.msra.mxu0 0.0
    %1169 = vmatprep.subr.mxu0 0.0
    %1170 = vmatpush2.xpose.msra.mxu0 0.0
    %1171 = vmatprep.subr.mxu0 0.0
    %1172 = vmatpush2.xpose.msra.mxu0 0.0
    %1173 = vmatprep.subr.mxu0 0.0
    %1174 = vmatpush2.xpose.msra.mxu0 0.0
    %1175 = vmatprep.subr.mxu0 0.0
    %1176 = vmatpush2.xpose.msra.mxu0 0.0
    %1177 = vmatprep.subr.mxu0 0.0
    %1178 = vmatpush2.xpose.msra.mxu0 0.0
    %1179 = vmatprep.subr.mxu0 0.0
    %1180 = vmatpush2.xpose.msra.mxu0 0.0
    %1181 = vmatprep.subr.mxu0 0.0
    %1182 = vmatpush2.xpose.msra.mxu0 0.0
    %1183 = vmatprep.subr.mxu0 0.0
    %1184 = vmatpush2.xpose.msra.mxu0 0.0
    %1185 = vmatprep.mubr.f32.mxu0 0.0
    %1186 = vmatmul.mubr.f32.gmra.mxu0 %v1047
    %v1187 = vpop.f32.mrf.mxu0
    %v1188 = vadd.f32 0.0, %v1187
    %v1189 = vpop.f32.mrf.mxu0
    %1190 = vdwg.mxu0
    %1191 = vmatprep.subr.mxu0 0.0
    %1192 = vmatpush1.xpose.msra.mxu0 0.0
    %1193 = vmatprep.subr.mxu0 0.0
    %1194 = vmatpush1.xpose.msra.mxu0 0.0
    %1195 = vmatprep.subr.mxu0 0.0
    %1196 = vmatpush1.xpose.msra.mxu0 0.0
    %1197 = vmatprep.subr.mxu0 0.0
    %1198 = vmatpush1.xpose.msra.mxu0 0.0
    %1199 = vmatprep.subr.mxu0 0.0
    %1200 = vmatpush1.xpose.msra.mxu0 0.0
    %1201 = vmatprep.subr.mxu0 0.0
    %1202 = vmatpush1.xpose.msra.mxu0 0.0
    %1203 = vmatprep.subr.mxu0 0.0
    %1204 = vmatpush1.xpose.msra.mxu0 0.0
    %1205 = vmatprep.subr.mxu0 0.0
    %1206 = vmatpush1.xpose.msra.mxu0 0.0
    %1207 = vmatprep.subr.mxu0 0.0
    %1208 = vmatpush1.xpose.msra.mxu0 0.0
    %1209 = vmatprep.subr.mxu0 0.0
    %1210 = vmatpush1.xpose.msra.mxu0 0.0
    %1211 = vmatprep.subr.mxu0 0.0
    %1212 = vmatpush1.xpose.msra.mxu0 0.0
    %1213 = vmatprep.subr.mxu0 0.0
    %1214 = vmatpush1.xpose.msra.mxu0 0.0
    %1215 = vmatprep.subr.mxu0 0.0
    %1216 = vmatpush1.xpose.msra.mxu0 0.0
    %1217 = vmatprep.subr.mxu0 0.0
    %1218 = vmatpush1.xpose.msra.mxu0 0.0
    %1219 = vmatprep.subr.mxu0 0.0
    %1220 = vmatpush1.xpose.msra.mxu0 %v143
    %1221 = vmatprep.subr.mxu0 0.0
    %1222 = vmatpush1.xpose.msra.mxu0 %v142
    %1223 = vmatprep.subr.mxu0 0.0
    %1224 = vmatpush2.xpose.msra.mxu0 0.0
    %1225 = vmatprep.subr.mxu0 0.0
    %1226 = vmatpush2.xpose.msra.mxu0 0.0
    %1227 = vmatprep.subr.mxu0 0.0
    %1228 = vmatpush2.xpose.msra.mxu0 0.0
    %1229 = vmatprep.subr.mxu0 0.0
    %1230 = vmatpush2.xpose.msra.mxu0 0.0
    %1231 = vmatprep.subr.mxu0 0.0
    %1232 = vmatpush2.xpose.msra.mxu0 0.0
    %1233 = vmatprep.subr.mxu0 0.0
    %1234 = vmatpush2.xpose.msra.mxu0 0.0
    %1235 = vmatprep.subr.mxu0 0.0
    %1236 = vmatpush2.xpose.msra.mxu0 0.0
    %1237 = vmatprep.subr.mxu0 0.0
    %1238 = vmatpush2.xpose.msra.mxu0 0.0
    %1239 = vmatprep.subr.mxu0 0.0
    %1240 = vmatpush2.xpose.msra.mxu0 0.0
    %1241 = vmatprep.subr.mxu0 0.0
    %1242 = vmatpush2.xpose.msra.mxu0 0.0
    %1243 = vmatprep.subr.mxu0 0.0
    %1244 = vmatpush2.xpose.msra.mxu0 0.0
    %1245 = vmatprep.subr.mxu0 0.0
    %1246 = vmatpush2.xpose.msra.mxu0 0.0
    %1247 = vmatprep.subr.mxu0 0.0
    %1248 = vmatpush2.xpose.msra.mxu0 0.0
    %1249 = vmatprep.subr.mxu0 0.0
    %1250 = vmatpush2.xpose.msra.mxu0 0.0
    %1251 = vmatprep.subr.mxu0 0.0
    %1252 = vmatpush2.xpose.msra.mxu0 0.0
    %1253 = vmatprep.subr.mxu0 0.0
    %1254 = vmatpush2.xpose.msra.mxu0 0.0
    %1255 = vmatprep.mubr.f32.mxu0 0.0
    %1256 = vmatmul.mubr.f32.gmra.mxu0 %v1048
    %v1257 = vpop.f32.mrf.mxu0
    %v1258 = vadd.f32 0.0, %v1257
    %v1259 = vpop.f32.mrf.mxu0
    %1260 = vdwg.mxu0
    %1261 = vmatprep.subr.mxu0 0.0
    %1262 = vmatpush1.xpose.msra.mxu0 0.0
    %1263 = vmatprep.subr.mxu0 0.0
    %1264 = vmatpush1.xpose.msra.mxu0 0.0
    %1265 = vmatprep.subr.mxu0 0.0
    %1266 = vmatpush1.xpose.msra.mxu0 0.0
    %1267 = vmatprep.subr.mxu0 0.0
    %1268 = vmatpush1.xpose.msra.mxu0 0.0
    %1269 = vmatprep.subr.mxu0 0.0
    %1270 = vmatpush1.xpose.msra.mxu0 0.0
    %1271 = vmatprep.subr.mxu0 0.0
    %1272 = vmatpush1.xpose.msra.mxu0 0.0
    %1273 = vmatprep.subr.mxu0 0.0
    %1274 = vmatpush1.xpose.msra.mxu0 0.0
    %1275 = vmatprep.subr.mxu0 0.0
    %1276 = vmatpush1.xpose.msra.mxu0 0.0
    %1277 = vmatprep.subr.mxu0 0.0
    %1278 = vmatpush1.xpose.msra.mxu0 0.0
    %1279 = vmatprep.subr.mxu0 0.0
    %1280 = vmatpush1.xpose.msra.mxu0 0.0
    %1281 = vmatprep.subr.mxu0 0.0
    %1282 = vmatpush1.xpose.msra.mxu0 0.0
    %1283 = vmatprep.subr.mxu0 0.0
    %1284 = vmatpush1.xpose.msra.mxu0 0.0
    %1285 = vmatprep.subr.mxu0 0.0
    %1286 = vmatpush1.xpose.msra.mxu0 0.0
    %1287 = vmatprep.subr.mxu0 0.0
    %1288 = vmatpush1.xpose.msra.mxu0 0.0
    %1289 = vmatprep.subr.mxu0 0.0
    %1290 = vmatpush1.xpose.msra.mxu0 %v145
    %1291 = vmatprep.subr.mxu0 0.0
    %1292 = vmatpush1.xpose.msra.mxu0 %v144
    %1293 = vmatprep.subr.mxu0 0.0
    %1294 = vmatpush2.xpose.msra.mxu0 0.0
    %1295 = vmatprep.subr.mxu0 0.0
    %1296 = vmatpush2.xpose.msra.mxu0 0.0
    %1297 = vmatprep.subr.mxu0 0.0
    %1298 = vmatpush2.xpose.msra.mxu0 0.0
    %1299 = vmatprep.subr.mxu0 0.0
    %1300 = vmatpush2.xpose.msra.mxu0 0.0
    %1301 = vmatprep.subr.mxu0 0.0
    %1302 = vmatpush2.xpose.msra.mxu0 0.0
    %1303 = vmatprep.subr.mxu0 0.0
    %1304 = vmatpush2.xpose.msra.mxu0 0.0
    %1305 = vmatprep.subr.mxu0 0.0
    %1306 = vmatpush2.xpose.msra.mxu0 0.0
    %1307 = vmatprep.subr.mxu0 0.0
    %1308 = vmatpush2.xpose.msra.mxu0 0.0
    %1309 = vmatprep.subr.mxu0 0.0
    %1310 = vmatpush2.xpose.msra.mxu0 0.0
    %1311 = vmatprep.subr.mxu0 0.0
    %1312 = vmatpush2.xpose.msra.mxu0 0.0
    %1313 = vmatprep.subr.mxu0 0.0
    %1314 = vmatpush2.xpose.msra.mxu0 0.0
    %1315 = vmatprep.subr.mxu0 0.0
    %1316 = vmatpush2.xpose.msra.mxu0 0.0
    %1317 = vmatprep.subr.mxu0 0.0
    %1318 = vmatpush2.xpose.msra.mxu0 0.0
    %1319 = vmatprep.subr.mxu0 0.0
    %1320 = vmatpush2.xpose.msra.mxu0 0.0
    %1321 = vmatprep.subr.mxu0 0.0
    %1322 = vmatpush2.xpose.msra.mxu0 0.0
    %1323 = vmatprep.subr.mxu0 0.0
    %1324 = vmatpush2.xpose.msra.mxu0 0.0
    %1325 = vmatprep.mubr.f32.mxu0 0.0
    %1326 = vmatmul.mubr.f32.gmra.mxu0 %v1049
    %v1327 = vpop.f32.mrf.mxu0
    %v1328 = vadd.f32 0.0, %v1327
    %v1329 = vpop.f32.mrf.mxu0
    %1330 = vdwg.mxu0
    %1331 = vmatprep.subr.mxu0 0.0
    %1332 = vmatpush1.xpose.msra.mxu0 0.0
    %1333 = vmatprep.subr.mxu0 0.0
    %1334 = vmatpush1.xpose.msra.mxu0 0.0
    %1335 = vmatprep.subr.mxu0 0.0
    %1336 = vmatpush1.xpose.msra.mxu0 0.0
    %1337 = vmatprep.subr.mxu0 0.0
    %1338 = vmatpush1.xpose.msra.mxu0 0.0
    %1339 = vmatprep.subr.mxu0 0.0
    %1340 = vmatpush1.xpose.msra.mxu0 0.0
    %1341 = vmatprep.subr.mxu0 0.0
    %1342 = vmatpush1.xpose.msra.mxu0 0.0
    %1343 = vmatprep.subr.mxu0 0.0
    %1344 = vmatpush1.xpose.msra.mxu0 0.0
    %1345 = vmatprep.subr.mxu0 0.0
    %1346 = vmatpush1.xpose.msra.mxu0 0.0
    %1347 = vmatprep.subr.mxu0 0.0
    %1348 = vmatpush1.xpose.msra.mxu0 0.0
    %1349 = vmatprep.subr.mxu0 0.0
    %1350 = vmatpush1.xpose.msra.mxu0 0.0
    %1351 = vmatprep.subr.mxu0 0.0
    %1352 = vmatpush1.xpose.msra.mxu0 0.0
    %1353 = vmatprep.subr.mxu0 0.0
    %1354 = vmatpush1.xpose.msra.mxu0 0.0
    %1355 = vmatprep.subr.mxu0 0.0
    %1356 = vmatpush1.xpose.msra.mxu0 0.0
    %1357 = vmatprep.subr.mxu0 0.0
    %1358 = vmatpush1.xpose.msra.mxu0 0.0
    %1359 = vmatprep.subr.mxu0 0.0
    %1360 = vmatpush1.xpose.msra.mxu0 %v147
    %1361 = vmatprep.subr.mxu0 0.0
    %1362 = vmatpush1.xpose.msra.mxu0 %v146
    %1363 = vmatprep.subr.mxu0 0.0
    %1364 = vmatpush2.xpose.msra.mxu0 0.0
    %1365 = vmatprep.subr.mxu0 0.0
    %1366 = vmatpush2.xpose.msra.mxu0 0.0
    %1367 = vmatprep.subr.mxu0 0.0
    %1368 = vmatpush2.xpose.msra.mxu0 0.0
    %1369 = vmatprep.subr.mxu0 0.0
    %1370 = vmatpush2.xpose.msra.mxu0 0.0
    %1371 = vmatprep.subr.mxu0 0.0
    %1372 = vmatpush2.xpose.msra.mxu0 0.0
    %1373 = vmatprep.subr.mxu0 0.0
    %1374 = vmatpush2.xpose.msra.mxu0 0.0
    %1375 = vmatprep.subr.mxu0 0.0
    %1376 = vmatpush2.xpose.msra.mxu0 0.0
    %1377 = vmatprep.subr.mxu0 0.0
    %1378 = vmatpush2.xpose.msra.mxu0 0.0
    %1379 = vmatprep.subr.mxu0 0.0
    %1380 = vmatpush2.xpose.msra.mxu0 0.0
    %1381 = vmatprep.subr.mxu0 0.0
    %1382 = vmatpush2.xpose.msra.mxu0 0.0
    %1383 = vmatprep.subr.mxu0 0.0
    %1384 = vmatpush2.xpose.msra.mxu0 0.0
    %1385 = vmatprep.subr.mxu0 0.0
    %1386 = vmatpush2.xpose.msra.mxu0 0.0
    %1387 = vmatprep.subr.mxu0 0.0
    %1388 = vmatpush2.xpose.msra.mxu0 0.0
    %1389 = vmatprep.subr.mxu0 0.0
    %1390 = vmatpush2.xpose.msra.mxu0 0.0
    %1391 = vmatprep.subr.mxu0 0.0
    %1392 = vmatpush2.xpose.msra.mxu0 0.0
    %1393 = vmatprep.subr.mxu0 0.0
    %1394 = vmatpush2.xpose.msra.mxu0 0.0
    %1395 = vmatprep.mubr.f32.mxu0 0.0
    %1396 = vmatmul.mubr.f32.gmra.mxu0 %v1050
    %v1397 = vpop.f32.mrf.mxu0
    %v1398 = vadd.f32 0.0, %v1397
    %v1399 = vpop.f32.mrf.mxu0
    %1400 = vdwg.mxu0
    %vm1401 = vcmask 126976
    %v1402 = vsel %vm1401, %v1118, -inf
    %1403 = vmax.xlane.f32.xlu0 %v1402
    %v1404 = vpop.xlane.xlu0 %1403
    %v1405 = vsel %vm1401, %v1188, -inf
    %1406 = vmax.xlane.f32.xlu0 %v1405
    %v1407 = vpop.xlane.xlu0 %1406
    %v1408 = vsel %vm1401, %v1258, -inf
    %1409 = vmax.xlane.f32.xlu0 %v1408
    %v1410 = vpop.xlane.xlu0 %1409
    %v1411 = vsel %vm1401, %v1328, -inf
    %1412 = vmax.xlane.f32.xlu0 %v1411
    %v1413 = vpop.xlane.xlu0 %1412
    %v1414 = vsel %vm1401, %v1398, -inf
    %1415 = vmax.xlane.f32.xlu0 %v1414
    %v1416 = vpop.xlane.xlu0 %1415
    %v1417 = vsub.f32 %v1118, %v1404
    %v1418 = vsub.f32 %v1188, %v1407
    %v1419 = vsub.f32 %v1258, %v1410
    %v1420 = vsub.f32 %v1328, %v1413
    %v1421 = vsub.f32 %v1398, %v1416
    %v1422 = vmul.f32 %v1417, 1.442695
    %v1423 = vpow.pop %v1422
    %v1424 = vmul.f32 %v1418, 1.442695
    %v1425 = vpow.pop %v1424
    %v1426 = vmul.f32 %v1419, 1.442695
    %v1427 = vpow.pop %v1426
    %v1428 = vmul.f32 %v1420, 1.442695
    %v1429 = vpow.pop %v1428
    %v1430 = vmul.f32 %v1421, 1.442695
    %v1431 = vpow.pop %v1430
    %v1432 = vsel %vm1401, %v1423, 0.0
    %1433 = vadd.xlane.f32.xlu0 %v1432
    %v1434 = vpop.xlane.xlu0 %1433
    %v1435 = vsel %vm1401, %v1425, 0.0
    %1436 = vadd.xlane.f32.xlu0 %v1435
    %v1437 = vpop.xlane.xlu0 %1436
    %v1438 = vsel %vm1401, %v1427, 0.0
    %1439 = vadd.xlane.f32.xlu0 %v1438
    %v1440 = vpop.xlane.xlu0 %1439
    %v1441 = vsel %vm1401, %v1429, 0.0
    %1442 = vadd.xlane.f32.xlu0 %v1441
    %v1443 = vpop.xlane.xlu0 %1442
    %v1444 = vsel %vm1401, %v1431, 0.0
    %1445 = vadd.xlane.f32.xlu0 %v1444
    %v1446 = vpop.xlane.xlu0 %1445
    %v1447 = vrcp.pop %v1434
    %v1448 = vrcp.pop %v1437
    %v1449 = vrcp.pop %v1440
    %v1450 = vrcp.pop %v1443
    %v1451 = vrcp.pop %v1446
    %v1452 = vmul.f32 %v1423, %v1447
    %v1453 = vmul.f32 %v1425, %v1448
    %v1454 = vmul.f32 %v1427, %v1449
    %v1455 = vmul.f32 %v1429, %v1450
    %v1456 = vmul.f32 %v1431, %v1451
    %vm1457 = vcmask 130048
    %v1459 = vsel %vm1457, %v1452, 0
    %1461 = vmatprep.subr.mxu0 0.0
    %1462 = vmatpush1.msra.mxu0 0.0
    %1463 = vmatprep.subr.mxu0 0.0
    %1464 = vmatpush1.msra.mxu0 0.0
    %1465 = vmatprep.subr.mxu0 0.0
    %1466 = vmatpush1.msra.mxu0 0.0
    %1467 = vmatprep.subr.mxu0 0.0
    %1468 = vmatpush1.msra.mxu0 0.0
    %1469 = vmatprep.subr.mxu0 0.0
    %1470 = vmatpush1.msra.mxu0 0.0
    %1471 = vmatprep.subr.mxu0 0.0
    %1472 = vmatpush1.msra.mxu0 0.0
    %1473 = vmatprep.subr.mxu0 0.0
    %1474 = vmatpush1.msra.mxu0 0.0
    %1475 = vmatprep.subr.mxu0 0.0
    %1476 = vmatpush1.msra.mxu0 0.0
    %1477 = vmatprep.subr.mxu0 0.0
    %1478 = vmatpush1.msra.mxu0 0.0
    %1479 = vmatprep.subr.mxu0 0.0
    %1480 = vmatpush1.msra.mxu0 0.0
    %1481 = vmatprep.subr.mxu0 0.0
    %1482 = vmatpush1.msra.mxu0 0.0
    %1483 = vmatprep.subr.mxu0 0.0
    %1484 = vmatpush1.msra.mxu0 0.0
    %1485 = vmatprep.subr.mxu0 0.0
    %1486 = vmatpush1.msra.mxu0 0.0
    %1487 = vmatprep.subr.mxu0 0.0
    %1488 = vmatpush1.msra.mxu0 0.0
    %1489 = vmatprep.subr.mxu0 0.0
    %1490 = vmatpush1.msra.mxu0 %v139
    %1491 = vmatprep.subr.mxu0 0.0
    %1492 = vmatpush1.msra.mxu0 %v138
    %1493 = vmatprep.subr.mxu0 0.0
    %1494 = vmatpush2.msra.mxu0 0.0
    %1495 = vmatprep.subr.mxu0 0.0
    %1496 = vmatpush2.msra.mxu0 0.0
    %1497 = vmatprep.subr.mxu0 0.0
    %1498 = vmatpush2.msra.mxu0 0.0
    %1499 = vmatprep.subr.mxu0 0.0
    %1500 = vmatpush2.msra.mxu0 0.0
    %1501 = vmatprep.subr.mxu0 0.0
    %1502 = vmatpush2.msra.mxu0 0.0
    %1503 = vmatprep.subr.mxu0 0.0
    %1504 = vmatpush2.msra.mxu0 0.0
    %1505 = vmatprep.subr.mxu0 0.0
    %1506 = vmatpush2.msra.mxu0 0.0
    %1507 = vmatprep.subr.mxu0 0.0
    %1508 = vmatpush2.msra.mxu0 0.0
    %1509 = vmatprep.subr.mxu0 0.0
    %1510 = vmatpush2.msra.mxu0 0.0
    %1511 = vmatprep.subr.mxu0 0.0
    %1512 = vmatpush2.msra.mxu0 0.0
    %1513 = vmatprep.subr.mxu0 0.0
    %1514 = vmatpush2.msra.mxu0 0.0
    %1515 = vmatprep.subr.mxu0 0.0
    %1516 = vmatpush2.msra.mxu0 0.0
    %1517 = vmatprep.subr.mxu0 0.0
    %1518 = vmatpush2.msra.mxu0 0.0
    %1519 = vmatprep.subr.mxu0 0.0
    %1520 = vmatpush2.msra.mxu0 0.0
    %1521 = vmatprep.subr.mxu0 0.0
    %1522 = vmatpush2.msra.mxu0 0.0
    %1523 = vmatprep.subr.mxu0 0.0
    %1524 = vmatpush2.msra.mxu0 0.0
    %1525 = vmatprep.mubr.f32.mxu0 0.0
    %1526 = vmatmul.mubr.f32.gmra.mxu0 %v1459
    %v1527 = vpop.f32.mrf.mxu0
    %v1528 = vadd.f32 0.0, %v1527
    %v1529 = vpop.f32.mrf.mxu0
    %1530 = vdwg.mxu0
    %v1532 = vsel %vm1457, %v1453, 0
    %1534 = vmatprep.subr.mxu0 0.0
    %1535 = vmatpush1.msra.mxu0 0.0
    %1536 = vmatprep.subr.mxu0 0.0
    %1537 = vmatpush1.msra.mxu0 0.0
    %1538 = vmatprep.subr.mxu0 0.0
    %1539 = vmatpush1.msra.mxu0 0.0
    %1540 = vmatprep.subr.mxu0 0.0
    %1541 = vmatpush1.msra.mxu0 0.0
    %1542 = vmatprep.subr.mxu0 0.0
    %1543 = vmatpush1.msra.mxu0 0.0
    %1544 = vmatprep.subr.mxu0 0.0
    %1545 = vmatpush1.msra.mxu0 0.0
    %1546 = vmatprep.subr.mxu0 0.0
    %1547 = vmatpush1.msra.mxu0 0.0
    %1548 = vmatprep.subr.mxu0 0.0
    %1549 = vmatpush1.msra.mxu0 0.0
    %1550 = vmatprep.subr.mxu0 0.0
    %1551 = vmatpush1.msra.mxu0 0.0
    %1552 = vmatprep.subr.mxu0 0.0
    %1553 = vmatpush1.msra.mxu0 0.0
    %1554 = vmatprep.subr.mxu0 0.0
    %1555 = vmatpush1.msra.mxu0 0.0
    %1556 = vmatprep.subr.mxu0 0.0
    %1557 = vmatpush1.msra.mxu0 0.0
    %1558 = vmatprep.subr.mxu0 0.0
    %1559 = vmatpush1.msra.mxu0 0.0
    %1560 = vmatprep.subr.mxu0 0.0
    %1561 = vmatpush1.msra.mxu0 0.0
    %1562 = vmatprep.subr.mxu0 0.0
    %1563 = vmatpush1.msra.mxu0 %v141
    %1564 = vmatprep.subr.mxu0 0.0
    %1565 = vmatpush1.msra.mxu0 %v140
    %1566 = vmatprep.subr.mxu0 0.0
    %1567 = vmatpush2.msra.mxu0 0.0
    %1568 = vmatprep.subr.mxu0 0.0
    %1569 = vmatpush2.msra.mxu0 0.0
    %1570 = vmatprep.subr.mxu0 0.0
    %1571 = vmatpush2.msra.mxu0 0.0
    %1572 = vmatprep.subr.mxu0 0.0
    %1573 = vmatpush2.msra.mxu0 0.0
    %1574 = vmatprep.subr.mxu0 0.0
    %1575 = vmatpush2.msra.mxu0 0.0
    %1576 = vmatprep.subr.mxu0 0.0
    %1577 = vmatpush2.msra.mxu0 0.0
    %1578 = vmatprep.subr.mxu0 0.0
    %1579 = vmatpush2.msra.mxu0 0.0
    %1580 = vmatprep.subr.mxu0 0.0
    %1581 = vmatpush2.msra.mxu0 0.0
    %1582 = vmatprep.subr.mxu0 0.0
    %1583 = vmatpush2.msra.mxu0 0.0
    %1584 = vmatprep.subr.mxu0 0.0
    %1585 = vmatpush2.msra.mxu0 0.0
    %1586 = vmatprep.subr.mxu0 0.0
    %1587 = vmatpush2.msra.mxu0 0.0
    %1588 = vmatprep.subr.mxu0 0.0
    %1589 = vmatpush2.msra.mxu0 0.0
    %1590 = vmatprep.subr.mxu0 0.0
    %1591 = vmatpush2.msra.mxu0 0.0
    %1592 = vmatprep.subr.mxu0 0.0
    %1593 = vmatpush2.msra.mxu0 0.0
    %1594 = vmatprep.subr.mxu0 0.0
    %1595 = vmatpush2.msra.mxu0 0.0
    %1596 = vmatprep.subr.mxu0 0.0
    %1597 = vmatpush2.msra.mxu0 0.0
    %1598 = vmatprep.mubr.f32.mxu0 0.0
    %1599 = vmatmul.mubr.f32.gmra.mxu0 %v1532
    %v1600 = vpop.f32.mrf.mxu0
    %v1601 = vadd.f32 0.0, %v1600
    %v1602 = vpop.f32.mrf.mxu0
    %1603 = vdwg.mxu0
    %v1605 = vsel %vm1457, %v1454, 0
    %1607 = vmatprep.subr.mxu0 0.0
    %1608 = vmatpush1.msra.mxu0 0.0
    %1609 = vmatprep.subr.mxu0 0.0
    %1610 = vmatpush1.msra.mxu0 0.0
    %1611 = vmatprep.subr.mxu0 0.0
    %1612 = vmatpush1.msra.mxu0 0.0
    %1613 = vmatprep.subr.mxu0 0.0
    %1614 = vmatpush1.msra.mxu0 0.0
    %1615 = vmatprep.subr.mxu0 0.0
    %1616 = vmatpush1.msra.mxu0 0.0
    %1617 = vmatprep.subr.mxu0 0.0
    %1618 = vmatpush1.msra.mxu0 0.0
    %1619 = vmatprep.subr.mxu0 0.0
    %1620 = vmatpush1.msra.mxu0 0.0
    %1621 = vmatprep.subr.mxu0 0.0
    %1622 = vmatpush1.msra.mxu0 0.0
    %1623 = vmatprep.subr.mxu0 0.0
    %1624 = vmatpush1.msra.mxu0 0.0
    %1625 = vmatprep.subr.mxu0 0.0
    %1626 = vmatpush1.msra.mxu0 0.0
    %1627 = vmatprep.subr.mxu0 0.0
    %1628 = vmatpush1.msra.mxu0 0.0
    %1629 = vmatprep.subr.mxu0 0.0
    %1630 = vmatpush1.msra.mxu0 0.0
    %1631 = vmatprep.subr.mxu0 0.0
    %1632 = vmatpush1.msra.mxu0 0.0
    %1633 = vmatprep.subr.mxu0 0.0
    %1634 = vmatpush1.msra.mxu0 0.0
    %1635 = vmatprep.subr.mxu0 0.0
    %1636 = vmatpush1.msra.mxu0 %v143
    %1637 = vmatprep.subr.mxu0 0.0
    %1638 = vmatpush1.msra.mxu0 %v142
    %1639 = vmatprep.subr.mxu0 0.0
    %1640 = vmatpush2.msra.mxu0 0.0
    %1641 = vmatprep.subr.mxu0 0.0
    %1642 = vmatpush2.msra.mxu0 0.0
    %1643 = vmatprep.subr.mxu0 0.0
    %1644 = vmatpush2.msra.mxu0 0.0
    %1645 = vmatprep.subr.mxu0 0.0
    %1646 = vmatpush2.msra.mxu0 0.0
    %1647 = vmatprep.subr.mxu0 0.0
    %1648 = vmatpush2.msra.mxu0 0.0
    %1649 = vmatprep.subr.mxu0 0.0
    %1650 = vmatpush2.msra.mxu0 0.0
    %1651 = vmatprep.subr.mxu0 0.0
    %1652 = vmatpush2.msra.mxu0 0.0
    %1653 = vmatprep.subr.mxu0 0.0
    %1654 = vmatpush2.msra.mxu0 0.0
    %1655 = vmatprep.subr.mxu0 0.0
    %1656 = vmatpush2.msra.mxu0 0.0
    %1657 = vmatprep.subr.mxu0 0.0
    %1658 = vmatpush2.msra.mxu0 0.0
    %1659 = vmatprep.subr.mxu0 0.0
    %1660 = vmatpush2.msra.mxu0 0.0
    %1661 = vmatprep.subr.mxu0 0.0
    %1662 = vmatpush2.msra.mxu0 0.0
    %1663 = vmatprep.subr.mxu0 0.0
    %1664 = vmatpush2.msra.mxu0 0.0
    %1665 = vmatprep.subr.mxu0 0.0
    %1666 = vmatpush2.msra.mxu0 0.0
    %1667 = vmatprep.subr.mxu0 0.0
    %1668 = vmatpush2.msra.mxu0 0.0
    %1669 = vmatprep.subr.mxu0 0.0
    %1670 = vmatpush2.msra.mxu0 0.0
    %1671 = vmatprep.mubr.f32.mxu0 0.0
    %1672 = vmatmul.mubr.f32.gmra.mxu0 %v1605
    %v1673 = vpop.f32.mrf.mxu0
    %v1674 = vadd.f32 0.0, %v1673
    %v1675 = vpop.f32.mrf.mxu0
    %1676 = vdwg.mxu0
    %v1678 = vsel %vm1457, %v1455, 0
    %1680 = vmatprep.subr.mxu0 0.0
    %1681 = vmatpush1.msra.mxu0 0.0
    %1682 = vmatprep.subr.mxu0 0.0
    %1683 = vmatpush1.msra.mxu0 0.0
    %1684 = vmatprep.subr.mxu0 0.0
    %1685 = vmatpush1.msra.mxu0 0.0
    %1686 = vmatprep.subr.mxu0 0.0
    %1687 = vmatpush1.msra.mxu0 0.0
    %1688 = vmatprep.subr.mxu0 0.0
    %1689 = vmatpush1.msra.mxu0 0.0
    %1690 = vmatprep.subr.mxu0 0.0
    %1691 = vmatpush1.msra.mxu0 0.0
    %1692 = vmatprep.subr.mxu0 0.0
    %1693 = vmatpush1.msra.mxu0 0.0
    %1694 = vmatprep.subr.mxu0 0.0
    %1695 = vmatpush1.msra.mxu0 0.0
    %1696 = vmatprep.subr.mxu0 0.0
    %1697 = vmatpush1.msra.mxu0 0.0
    %1698 = vmatprep.subr.mxu0 0.0
    %1699 = vmatpush1.msra.mxu0 0.0
    %1700 = vmatprep.subr.mxu0 0.0
    %1701 = vmatpush1.msra.mxu0 0.0
    %1702 = vmatprep.subr.mxu0 0.0
    %1703 = vmatpush1.msra.mxu0 0.0
    %1704 = vmatprep.subr.mxu0 0.0
    %1705 = vmatpush1.msra.mxu0 0.0
    %1706 = vmatprep.subr.mxu0 0.0
    %1707 = vmatpush1.msra.mxu0 0.0
    %1708 = vmatprep.subr.mxu0 0.0
    %1709 = vmatpush1.msra.mxu0 %v145
    %1710 = vmatprep.subr.mxu0 0.0
    %1711 = vmatpush1.msra.mxu0 %v144
    %1712 = vmatprep.subr.mxu0 0.0
    %1713 = vmatpush2.msra.mxu0 0.0
    %1714 = vmatprep.subr.mxu0 0.0
    %1715 = vmatpush2.msra.mxu0 0.0
    %1716 = vmatprep.subr.mxu0 0.0
    %1717 = vmatpush2.msra.mxu0 0.0
    %1718 = vmatprep.subr.mxu0 0.0
    %1719 = vmatpush2.msra.mxu0 0.0
    %1720 = vmatprep.subr.mxu0 0.0
    %1721 = vmatpush2.msra.mxu0 0.0
    %1722 = vmatprep.subr.mxu0 0.0
    %1723 = vmatpush2.msra.mxu0 0.0
    %1724 = vmatprep.subr.mxu0 0.0
    %1725 = vmatpush2.msra.mxu0 0.0
    %1726 = vmatprep.subr.mxu0 0.0
    %1727 = vmatpush2.msra.mxu0 0.0
    %1728 = vmatprep.subr.mxu0 0.0
    %1729 = vmatpush2.msra.mxu0 0.0
    %1730 = vmatprep.subr.mxu0 0.0
    %1731 = vmatpush2.msra.mxu0 0.0
    %1732 = vmatprep.subr.mxu0 0.0
    %1733 = vmatpush2.msra.mxu0 0.0
    %1734 = vmatprep.subr.mxu0 0.0
    %1735 = vmatpush2.msra.mxu0 0.0
    %1736 = vmatprep.subr.mxu0 0.0
    %1737 = vmatpush2.msra.mxu0 0.0
    %1738 = vmatprep.subr.mxu0 0.0
    %1739 = vmatpush2.msra.mxu0 0.0
    %1740 = vmatprep.subr.mxu0 0.0
    %1741 = vmatpush2.msra.mxu0 0.0
    %1742 = vmatprep.subr.mxu0 0.0
    %1743 = vmatpush2.msra.mxu0 0.0
    %1744 = vmatprep.mubr.f32.mxu0 0.0
    %1745 = vmatmul.mubr.f32.gmra.mxu0 %v1678
    %v1746 = vpop.f32.mrf.mxu0
    %v1747 = vadd.f32 0.0, %v1746
    %v1748 = vpop.f32.mrf.mxu0
    %1749 = vdwg.mxu0
    %v1751 = vsel %vm1457, %v1456, 0
    %1753 = vmatprep.subr.mxu0 0.0
    %1754 = vmatpush1.msra.mxu0 0.0
    %1755 = vmatprep.subr.mxu0 0.0
    %1756 = vmatpush1.msra.mxu0 0.0
    %1757 = vmatprep.subr.mxu0 0.0
    %1758 = vmatpush1.msra.mxu0 0.0
    %1759 = vmatprep.subr.mxu0 0.0
    %1760 = vmatpush1.msra.mxu0 0.0
    %1761 = vmatprep.subr.mxu0 0.0
    %1762 = vmatpush1.msra.mxu0 0.0
    %1763 = vmatprep.subr.mxu0 0.0
    %1764 = vmatpush1.msra.mxu0 0.0
    %1765 = vmatprep.subr.mxu0 0.0
    %1766 = vmatpush1.msra.mxu0 0.0
    %1767 = vmatprep.subr.mxu0 0.0
    %1768 = vmatpush1.msra.mxu0 0.0
    %1769 = vmatprep.subr.mxu0 0.0
    %1770 = vmatpush1.msra.mxu0 0.0
    %1771 = vmatprep.subr.mxu0 0.0
    %1772 = vmatpush1.msra.mxu0 0.0
    %1773 = vmatprep.subr.mxu0 0.0
    %1774 = vmatpush1.msra.mxu0 0.0
    %1775 = vmatprep.subr.mxu0 0.0
    %1776 = vmatpush1.msra.mxu0 0.0
    %1777 = vmatprep.subr.mxu0 0.0
    %1778 = vmatpush1.msra.mxu0 0.0
    %1779 = vmatprep.subr.mxu0 0.0
    %1780 = vmatpush1.msra.mxu0 0.0
    %1781 = vmatprep.subr.mxu0 0.0
    %1782 = vmatpush1.msra.mxu0 %v147
    %1783 = vmatprep.subr.mxu0 0.0
    %1784 = vmatpush1.msra.mxu0 %v146
    %1785 = vmatprep.subr.mxu0 0.0
    %1786 = vmatpush2.msra.mxu0 0.0
    %1787 = vmatprep.subr.mxu0 0.0
    %1788 = vmatpush2.msra.mxu0 0.0
    %1789 = vmatprep.subr.mxu0 0.0
    %1790 = vmatpush2.msra.mxu0 0.0
    %1791 = vmatprep.subr.mxu0 0.0
    %1792 = vmatpush2.msra.mxu0 0.0
    %1793 = vmatprep.subr.mxu0 0.0
    %1794 = vmatpush2.msra.mxu0 0.0
    %1795 = vmatprep.subr.mxu0 0.0
    %1796 = vmatpush2.msra.mxu0 0.0
    %1797 = vmatprep.subr.mxu0 0.0
    %1798 = vmatpush2.msra.mxu0 0.0
    %1799 = vmatprep.subr.mxu0 0.0
    %1800 = vmatpush2.msra.mxu0 0.0
    %1801 = vmatprep.subr.mxu0 0.0
    %1802 = vmatpush2.msra.mxu0 0.0
    %1803 = vmatprep.subr.mxu0 0.0
    %1804 = vmatpush2.msra.mxu0 0.0
    %1805 = vmatprep.subr.mxu0 0.0
    %1806 = vmatpush2.msra.mxu0 0.0
    %1807 = vmatprep.subr.mxu0 0.0
    %1808 = vmatpush2.msra.mxu0 0.0
    %1809 = vmatprep.subr.mxu0 0.0
    %1810 = vmatpush2.msra.mxu0 0.0
    %1811 = vmatprep.subr.mxu0 0.0
    %1812 = vmatpush2.msra.mxu0 0.0
    %1813 = vmatprep.subr.mxu0 0.0
    %1814 = vmatpush2.msra.mxu0 0.0
    %1815 = vmatprep.subr.mxu0 0.0
    %1816 = vmatpush2.msra.mxu0 0.0
    %1817 = vmatprep.mubr.f32.mxu0 0.0
    %1818 = vmatmul.mubr.f32.gmra.mxu0 %v1751
    %v1819 = vpop.f32.mrf.mxu0
    %v1820 = vadd.f32 0.0, %v1819
    %v1821 = vpop.f32.mrf.mxu0
    %1822 = vdwg.mxu0
    %1824 = vset.pattern.permute.xlu0 0
    %1825 = vperm.xlu0 %1824, %v150
    %v1826 = vpop.permute.xlu0 %1825
    %v1828 = vmul.f32 %v1528, %v1826
    %v1829 = vmul.f32 %v1601, %v1826
    %v1830 = vmul.f32 %v1674, %v1826
    %v1831 = vmul.f32 %v1747, %v1826
    %v1832 = vmul.f32 %v1820, %v1826
    %1834 = vset.pattern.permute.xlu0 0
    %1835 = vperm.xlu0 %1834, %v151
    %v1836 = vpop.permute.xlu0 %1835
    %v1838 = vadd.f32 %v1828, %v1836
    %v1839 = vadd.f32 %v1829, %v1836
    %v1840 = vadd.f32 %v1830, %v1836
    %v1841 = vadd.f32 %v1831, %v1836
    %v1842 = vadd.f32 %v1832, %v1836
    %v1843 = vmul.f32 %v1838, %v1838
    %v1844 = vmul.f32 %v1839, %v1839
    %v1845 = vmul.f32 %v1840, %v1840
    %v1846 = vmul.f32 %v1841, %v1841
    %v1847 = vmul.f32 %v1842, %v1842
    %v1848 = vsel %vm512, %v1843, 0.0
    %1849 = vadd.xlane.f32.xlu0 %v1848
    %v1850 = vpop.xlane.xlu0 %1849
    %v1851 = vsel %vm512, %v1844, 0.0
    %1852 = vadd.xlane.f32.xlu0 %v1851
    %v1853 = vpop.xlane.xlu0 %1852
    %v1854 = vsel %vm512, %v1845, 0.0
    %1855 = vadd.xlane.f32.xlu0 %v1854
    %v1856 = vpop.xlane.xlu0 %1855
    %v1857 = vsel %vm512, %v1846, 0.0
    %1858 = vadd.xlane.f32.xlu0 %v1857
    %v1859 = vpop.xlane.xlu0 %1858
    %v1860 = vsel %vm512, %v1847, 0.0
    %1861 = vadd.xlane.f32.xlu0 %v1860
    %v1862 = vpop.xlane.xlu0 %1861
    %v1863 = vrsqrt.pop %v1850
    %v1864 = vrsqrt.pop %v1853
    %v1865 = vrsqrt.pop %v1856
    %v1866 = vrsqrt.pop %v1859
    %v1867 = vrsqrt.pop %v1862
    %v1868 = vmul.f32 %v1863, 0.4472136
    %v1869 = vmul.f32 %v1864, 0.4472136
    %v1870 = vmul.f32 %v1865, 0.4472136
    %v1871 = vmul.f32 %v1866, 0.4472136
    %v1872 = vmul.f32 %v1867, 0.4472136
    %v1873 = vmul.f32 %v1838, %v1868
    %v1874 = vmul.f32 %v1839, %v1869
    %v1875 = vmul.f32 %v1840, %v1870
    %v1876 = vmul.f32 %v1841, %v1871
    %v1877 = vmul.f32 %v1842, %v1872
    %v1878 = vld [vmem:[%s4] sm:$0x1f]
    %v1879 = vld [vmem:[%s4 + $0x8] sm:$0x1f]
    %v1880 = vld [vmem:[%s5] sm:$0x1f]
    %v1881 = vld [vmem:[%s5 + $0x8] sm:$0x1f]
    %v1882 = vmul.f32 %v1041, %v1878
    %v1883 = vmul.f32 %v1041, %v1879
    %v1884 = vmul.f32 %v1042, %v1878
    %v1885 = vmul.f32 %v1042, %v1879
    %v1886 = vmul.f32 %v1043, %v1878
    %v1887 = vmul.f32 %v1043, %v1879
    %v1888 = vmul.f32 %v1044, %v1878
    %v1889 = vmul.f32 %v1044, %v1879
    %v1890 = vmul.f32 %v1045, %v1878
    %v1891 = vmul.f32 %v1045, %v1879
    %v1892 = vsel %vm512, %v1882, 0.0
    %1893 = vadd.xlane.f32.xlu0 %v1892
    %v1894 = vpop.xlane.xlu0 %1893
    %v1895 = vsel %vm512, %v1883, 0.0
    %1896 = vadd.xlane.f32.xlu0 %v1895
    %v1897 = vpop.xlane.xlu0 %1896
    %v1898 = vsel %vm512, %v1884, 0.0
    %1899 = vadd.xlane.f32.xlu0 %v1898
    %v1900 = vpop.xlane.xlu0 %1899
    %v1901 = vsel %vm512, %v1885, 0.0
    %1902 = vadd.xlane.f32.xlu0 %v1901
    %v1903 = vpop.xlane.xlu0 %1902
    %v1904 = vsel %vm512, %v1886, 0.0
    %1905 = vadd.xlane.f32.xlu0 %v1904
    %v1906 = vpop.xlane.xlu0 %1905
    %v1907 = vsel %vm512, %v1887, 0.0
    %1908 = vadd.xlane.f32.xlu0 %v1907
    %v1909 = vpop.xlane.xlu0 %1908
    %v1910 = vsel %vm512, %v1888, 0.0
    %1911 = vadd.xlane.f32.xlu0 %v1910
    %v1912 = vpop.xlane.xlu0 %1911
    %v1913 = vsel %vm512, %v1889, 0.0
    %1914 = vadd.xlane.f32.xlu0 %v1913
    %v1915 = vpop.xlane.xlu0 %1914
    %v1916 = vsel %vm512, %v1890, 0.0
    %1917 = vadd.xlane.f32.xlu0 %v1916
    %v1918 = vpop.xlane.xlu0 %1917
    %v1919 = vsel %vm512, %v1891, 0.0
    %1920 = vadd.xlane.f32.xlu0 %v1919
    %v1921 = vpop.xlane.xlu0 %1920
    %v1932 = vlaneseq
    %v1933 = vand.u32 %v1932, 127
    %v1934 = vlaneseq
    %v1935 = vshrl.u32 %v1934, 7
    %v1936 = vsub.s32 %v1933, %v1935
    %v1937 = vrot.slane %v1894, %v1936
    %v1938 = vlaneseq
    %v1939 = vshrl.u32 %v1938, 7
    %v1940 = vsub.s32 %v1933, %v1939
    %v1941 = vrot.slane %v1897, %v1940
    %v1942 = vlaneseq
    %v1943 = vshrl.u32 %v1942, 7
    %v1944 = vsub.s32 %v1933, %v1943
    %v1945 = vrot.slane %v1900, %v1944
    %v1946 = vlaneseq
    %v1947 = vshrl.u32 %v1946, 7
    %v1948 = vsub.s32 %v1933, %v1947
    %v1949 = vrot.slane %v1903, %v1948
    %v1950 = vlaneseq
    %v1951 = vshrl.u32 %v1950, 7
    %v1952 = vsub.s32 %v1933, %v1951
    %v1953 = vrot.slane %v1906, %v1952
    %v1954 = vlaneseq
    %v1955 = vshrl.u32 %v1954, 7
    %v1956 = vsub.s32 %v1933, %v1955
    %v1957 = vrot.slane %v1909, %v1956
    %v1958 = vlaneseq
    %v1959 = vshrl.u32 %v1958, 7
    %v1960 = vsub.s32 %v1933, %v1959
    %v1961 = vrot.slane %v1912, %v1960
    %v1962 = vlaneseq
    %v1963 = vshrl.u32 %v1962, 7
    %v1964 = vsub.s32 %v1933, %v1963
    %v1965 = vrot.slane %v1915, %v1964
    %v1966 = vlaneseq
    %v1967 = vshrl.u32 %v1966, 7
    %v1968 = vsub.s32 %v1933, %v1967
    %v1969 = vrot.slane %v1918, %v1968
    %v1970 = vlaneseq
    %v1971 = vshrl.u32 %v1970, 7
    %v1972 = vsub.s32 %v1933, %v1971
    %v1973 = vrot.slane %v1921, %v1972
    %vm1974 = vcmask 1041409
    %v1975 = vsel %vm1974, %v1941, %v1937
    %v1976 = vsel %vm1974, %v1949, %v1945
    %v1977 = vsel %vm1974, %v1957, %v1953
    %v1978 = vsel %vm1974, %v1965, %v1961
    %v1979 = vsel %vm1974, %v1973, %v1969
    %vm1985 = vcmask 33792
    %v1986 = vsel %vm1985, %v1975, 0.0
    %1987 = vadd.xlane.f32.xlu0 %v1986
    %v1988 = vpop.xlane.xlu0 %1987
    %v1989 = vsel %vm1985, %v1976, 0.0
    %1990 = vadd.xlane.f32.xlu0 %v1989
    %v1991 = vpop.xlane.xlu0 %1990
    %v1992 = vsel %vm1985, %v1977, 0.0
    %1993 = vadd.xlane.f32.xlu0 %v1992
    %v1994 = vpop.xlane.xlu0 %1993
    %v1995 = vsel %vm1985, %v1978, 0.0
    %1996 = vadd.xlane.f32.xlu0 %v1995
    %v1997 = vpop.xlane.xlu0 %1996
    %v1998 = vsel %vm1985, %v1979, 0.0
    %1999 = vadd.xlane.f32.xlu0 %v1998
    %v2000 = vpop.xlane.xlu0 %1999
    %v2001 = vmul.f32 %v1873, %v1880
    %v2002 = vmul.f32 %v1873, %v1881
    %v2003 = vmul.f32 %v1874, %v1880
    %v2004 = vmul.f32 %v1874, %v1881
    %v2005 = vmul.f32 %v1875, %v1880
    %v2006 = vmul.f32 %v1875, %v1881
    %v2007 = vmul.f32 %v1876, %v1880
    %v2008 = vmul.f32 %v1876, %v1881
    %v2009 = vmul.f32 %v1877, %v1880
    %v2010 = vmul.f32 %v1877, %v1881
    %v2011 = vsel %vm512, %v2001, 0.0
    %2012 = vadd.xlane.f32.xlu0 %v2011
    %v2013 = vpop.xlane.xlu0 %2012
    %v2014 = vsel %vm512, %v2002, 0.0
    %2015 = vadd.xlane.f32.xlu0 %v2014
    %v2016 = vpop.xlane.xlu0 %2015
    %v2017 = vsel %vm512, %v2003, 0.0
    %2018 = vadd.xlane.f32.xlu0 %v2017
    %v2019 = vpop.xlane.xlu0 %2018
    %v2020 = vsel %vm512, %v2004, 0.0
    %2021 = vadd.xlane.f32.xlu0 %v2020
    %v2022 = vpop.xlane.xlu0 %2021
    %v2023 = vsel %vm512, %v2005, 0.0
    %2024 = vadd.xlane.f32.xlu0 %v2023
    %v2025 = vpop.xlane.xlu0 %2024
    %v2026 = vsel %vm512, %v2006, 0.0
    %2027 = vadd.xlane.f32.xlu0 %v2026
    %v2028 = vpop.xlane.xlu0 %2027
    %v2029 = vsel %vm512, %v2007, 0.0
    %2030 = vadd.xlane.f32.xlu0 %v2029
    %v2031 = vpop.xlane.xlu0 %2030
    %v2032 = vsel %vm512, %v2008, 0.0
    %2033 = vadd.xlane.f32.xlu0 %v2032
    %v2034 = vpop.xlane.xlu0 %2033
    %v2035 = vsel %vm512, %v2009, 0.0
    %2036 = vadd.xlane.f32.xlu0 %v2035
    %v2037 = vpop.xlane.xlu0 %2036
    %v2038 = vsel %vm512, %v2010, 0.0
    %2039 = vadd.xlane.f32.xlu0 %v2038
    %v2040 = vpop.xlane.xlu0 %2039
    %v2051 = vlaneseq
    %v2052 = vshrl.u32 %v2051, 7
    %v2053 = vsub.s32 %v1933, %v2052
    %v2054 = vrot.slane %v2013, %v2053
    %v2055 = vlaneseq
    %v2056 = vshrl.u32 %v2055, 7
    %v2057 = vsub.s32 %v1933, %v2056
    %v2058 = vrot.slane %v2016, %v2057
    %v2059 = vlaneseq
    %v2060 = vshrl.u32 %v2059, 7
    %v2061 = vsub.s32 %v1933, %v2060
    %v2062 = vrot.slane %v2019, %v2061
    %v2063 = vlaneseq
    %v2064 = vshrl.u32 %v2063, 7
    %v2065 = vsub.s32 %v1933, %v2064
    %v2066 = vrot.slane %v2022, %v2065
    %v2067 = vlaneseq
    %v2068 = vshrl.u32 %v2067, 7
    %v2069 = vsub.s32 %v1933, %v2068
    %v2070 = vrot.slane %v2025, %v2069
    %v2071 = vlaneseq
    %v2072 = vshrl.u32 %v2071, 7
    %v2073 = vsub.s32 %v1933, %v2072
    %v2074 = vrot.slane %v2028, %v2073
    %v2075 = vlaneseq
    %v2076 = vshrl.u32 %v2075, 7
    %v2077 = vsub.s32 %v1933, %v2076
    %v2078 = vrot.slane %v2031, %v2077
    %v2079 = vlaneseq
    %v2080 = vshrl.u32 %v2079, 7
    %v2081 = vsub.s32 %v1933, %v2080
    %v2082 = vrot.slane %v2034, %v2081
    %v2083 = vlaneseq
    %v2084 = vshrl.u32 %v2083, 7
    %v2085 = vsub.s32 %v1933, %v2084
    %v2086 = vrot.slane %v2037, %v2085
    %v2087 = vlaneseq
    %v2088 = vshrl.u32 %v2087, 7
    %v2089 = vsub.s32 %v1933, %v2088
    %v2090 = vrot.slane %v2040, %v2089
    %v2091 = vsel %vm1974, %v2058, %v2054
    %v2092 = vsel %vm1974, %v2066, %v2062
    %v2093 = vsel %vm1974, %v2074, %v2070
    %v2094 = vsel %vm1974, %v2082, %v2078
    %v2095 = vsel %vm1974, %v2090, %v2086
    %v2101 = vsel %vm1985, %v2091, 0.0
    %2102 = vadd.xlane.f32.xlu0 %v2101
    %v2103 = vpop.xlane.xlu0 %2102
    %v2104 = vsel %vm1985, %v2092, 0.0
    %2105 = vadd.xlane.f32.xlu0 %v2104
    %v2106 = vpop.xlane.xlu0 %2105
    %v2107 = vsel %vm1985, %v2093, 0.0
    %2108 = vadd.xlane.f32.xlu0 %v2107
    %v2109 = vpop.xlane.xlu0 %2108
    %v2110 = vsel %vm1985, %v2094, 0.0
    %2111 = vadd.xlane.f32.xlu0 %v2110
    %v2112 = vpop.xlane.xlu0 %2111
    %v2113 = vsel %vm1985, %v2095, 0.0
    %2114 = vadd.xlane.f32.xlu0 %v2113
    %v2115 = vpop.xlane.xlu0 %2114
    %v2116 = vadd.f32 %v1988, %v2103
    %v2117 = vadd.f32 %v1991, %v2106
    %v2118 = vadd.f32 %v1994, %v2109
    %v2119 = vadd.f32 %v1997, %v2112
    %v2120 = vadd.f32 %v2000, %v2115
    %v2121 = vld [vmem:[%s6] sm:$0x1]
    %v2123 = vlaneseq
    %v2124 = vshrl.u32 %v2123, 7
    %v2125 = vsub.s32 0, %v2124
    %v2126 = vrot.slane %v2121, %v2125
    %2128 = vbcast.lane.b32.xlu0 %v2126, 256
    %v2129 = vpop.permute.xlu0 %2128
    %v2131 = vadd.f32 %v2116, %v2129
    %v2132 = vadd.f32 %v2117, %v2129
    %v2133 = vadd.f32 %v2118, %v2129
    %v2134 = vadd.f32 %v2119, %v2129
    %v2135 = vadd.f32 %v2120, %v2129
    %2141 = vset.pattern.permute.xlu0 0
    %2142 = vperm.xlu0 %2141, %v2131
    %v2143 = vpop.permute.xlu0 %2142
    %2144 = vset.pattern.permute.xlu0 0
    %2145 = vperm.xlu0 %2144, %v2132
    %v2146 = vpop.permute.xlu0 %2145
    %2147 = vset.pattern.permute.xlu0 0
    %2148 = vperm.xlu0 %2147, %v2133
    %v2149 = vpop.permute.xlu0 %2148
    %2150 = vset.pattern.permute.xlu0 0
    %2151 = vperm.xlu0 %2150, %v2134
    %v2152 = vpop.permute.xlu0 %2151
    %2153 = vset.pattern.permute.xlu0 0
    %2154 = vperm.xlu0 %2153, %v2135
    %v2155 = vpop.permute.xlu0 %2154
    %v2156 = vlaneseq
    %v2157 = vshrl.u32 %v2156, 7
    %v2158 = vsub.s32 %v1933, %v2157
    %v2159 = vrot.slane %v2143, %v2158
    %v2160 = vlaneseq
    %v2161 = vshrl.u32 %v2160, 7
    %v2162 = vsub.s32 %v1933, %v2161
    %v2163 = vrot.slane %v2146, %v2162
    %v2164 = vlaneseq
    %v2165 = vshrl.u32 %v2164, 7
    %v2166 = vsub.s32 %v1933, %v2165
    %v2167 = vrot.slane %v2149, %v2166
    %v2168 = vlaneseq
    %v2169 = vshrl.u32 %v2168, 7
    %v2170 = vsub.s32 %v1933, %v2169
    %v2171 = vrot.slane %v2152, %v2170
    %v2172 = vlaneseq
    %v2173 = vshrl.u32 %v2172, 7
    %v2174 = vsub.s32 %v1933, %v2173
    %v2175 = vrot.slane %v2155, %v2174
    %v2176 = vsel %vm1974, %v2163, %v2159
    %vm2177 = vcmask 1042434
    %v2178 = vsel %vm2177, %v2167, %v2176
    %vm2179 = vcmask 1043459
    %v2180 = vsel %vm2179, %v2171, %v2178
    %vm2181 = vcmask 1044484
    %v2182 = vsel %vm2181, %v2175, %v2180
    %vm2184 = vcmask 12288
    %v2185 = vsel %vm2184, %v2182, -inf
    %2186 = vmax.xlane.f32.xlu0 %v2185
    %v2187 = vpop.xlane.xlu0 %2186
    %v2189 = vlaneseq
    %v2190 = vshrl.u32 %v2189, 7
    %v2191 = vsub.s32 0, %v2190
    %v2192 = vrot.slane %v2187, %v2191
    %v2193 = vlaneseq
    %v2194 = vshrl.u32 %v2193, 7
    %v2195 = vsub.s32 1, %v2194
    %v2196 = vrot.slane %v2187, %v2195
    %v2197 = vlaneseq
    %v2198 = vshrl.u32 %v2197, 7
    %v2199 = vsub.s32 2, %v2198
    %v2200 = vrot.slane %v2187, %v2199
    %v2201 = vlaneseq
    %v2202 = vshrl.u32 %v2201, 7
    %v2203 = vsub.s32 3, %v2202
    %v2204 = vrot.slane %v2187, %v2203
    %v2205 = vlaneseq
    %v2206 = vshrl.u32 %v2205, 7
    %v2207 = vsub.s32 4, %v2206
    %v2208 = vrot.slane %v2187, %v2207
    %v2214 = vsub.f32 %v2131, %v2192
    %v2215 = vsub.f32 %v2132, %v2196
    %v2216 = vsub.f32 %v2133, %v2200
    %v2217 = vsub.f32 %v2134, %v2204
    %v2218 = vsub.f32 %v2135, %v2208
    %v2219 = vmul.f32 %v2214, 1.442695
    %v2220 = vpow.pop %v2219
    %v2221 = vmul.f32 %v2215, 1.442695
    %v2222 = vpow.pop %v2221
    %v2223 = vmul.f32 %v2216, 1.442695
    %v2224 = vpow.pop %v2223
    %v2225 = vmul.f32 %v2217, 1.442695
    %v2226 = vpow.pop %v2225
    %v2227 = vmul.f32 %v2218, 1.442695
    %v2228 = vpow.pop %v2227
    %2234 = vset.pattern.permute.xlu0 0
    %2235 = vperm.xlu0 %2234, %v2220
    %v2236 = vpop.permute.xlu0 %2235
    %2237 = vset.pattern.permute.xlu0 0
    %2238 = vperm.xlu0 %2237, %v2222
    %v2239 = vpop.permute.xlu0 %2238
    %2240 = vset.pattern.permute.xlu0 0
    %2241 = vperm.xlu0 %2240, %v2224
    %v2242 = vpop.permute.xlu0 %2241
    %2243 = vset.pattern.permute.xlu0 0
    %2244 = vperm.xlu0 %2243, %v2226
    %v2245 = vpop.permute.xlu0 %2244
    %2246 = vset.pattern.permute.xlu0 0
    %2247 = vperm.xlu0 %2246, %v2228
    %v2248 = vpop.permute.xlu0 %2247
    %v2249 = vlaneseq
    %v2250 = vshrl.u32 %v2249, 7
    %v2251 = vsub.s32 %v1933, %v2250
    %v2252 = vrot.slane %v2236, %v2251
    %v2253 = vlaneseq
    %v2254 = vshrl.u32 %v2253, 7
    %v2255 = vsub.s32 %v1933, %v2254
    %v2256 = vrot.slane %v2239, %v2255
    %v2257 = vlaneseq
    %v2258 = vshrl.u32 %v2257, 7
    %v2259 = vsub.s32 %v1933, %v2258
    %v2260 = vrot.slane %v2242, %v2259
    %v2261 = vlaneseq
    %v2262 = vshrl.u32 %v2261, 7
    %v2263 = vsub.s32 %v1933, %v2262
    %v2264 = vrot.slane %v2245, %v2263
    %v2265 = vlaneseq
    %v2266 = vshrl.u32 %v2265, 7
    %v2267 = vsub.s32 %v1933, %v2266
    %v2268 = vrot.slane %v2248, %v2267
    %v2269 = vsel %vm1974, %v2256, %v2252
    %v2270 = vsel %vm2177, %v2260, %v2269
    %v2271 = vsel %vm2179, %v2264, %v2270
    %v2272 = vsel %vm2181, %v2268, %v2271
    %v2274 = vsel %vm2184, %v2272, 0.0
    %2275 = vadd.xlane.f32.xlu0 %v2274
    %v2276 = vpop.xlane.xlu0 %2275
    %v2278 = vlaneseq
    %v2279 = vshrl.u32 %v2278, 7
    %v2280 = vsub.s32 0, %v2279
    %v2281 = vrot.slane %v2276, %v2280
    %v2282 = vlaneseq
    %v2283 = vshrl.u32 %v2282, 7
    %v2284 = vsub.s32 1, %v2283
    %v2285 = vrot.slane %v2276, %v2284
    %v2286 = vlaneseq
    %v2287 = vshrl.u32 %v2286, 7
    %v2288 = vsub.s32 2, %v2287
    %v2289 = vrot.slane %v2276, %v2288
    %v2290 = vlaneseq
    %v2291 = vshrl.u32 %v2290, 7
    %v2292 = vsub.s32 3, %v2291
    %v2293 = vrot.slane %v2276, %v2292
    %v2294 = vlaneseq
    %v2295 = vshrl.u32 %v2294, 7
    %v2296 = vsub.s32 4, %v2295
    %v2297 = vrot.slane %v2276, %v2296
    %v2303 = vrcp.pop %v2281
    %v2304 = vmul.f32 %v2220, %v2303
    %v2305 = vrcp.pop %v2285
    %v2306 = vmul.f32 %v2222, %v2305
    %v2307 = vrcp.pop %v2289
    %v2308 = vmul.f32 %v2224, %v2307
    %v2309 = vrcp.pop %v2293
    %v2310 = vmul.f32 %v2226, %v2309
    %v2311 = vrcp.pop %v2297
    %v2312 = vmul.f32 %v2228, %v2311
    %2318 = vset.pattern.permute.xlu0 0
    %2319 = vperm.xlu0 %2318, %v2304
    %v2320 = vpop.permute.xlu0 %2319
    %2321 = vset.pattern.permute.xlu0 0
    %2322 = vperm.xlu0 %2321, %v2306
    %v2323 = vpop.permute.xlu0 %2322
    %2324 = vset.pattern.permute.xlu0 0
    %2325 = vperm.xlu0 %2324, %v2308
    %v2326 = vpop.permute.xlu0 %2325
    %2327 = vset.pattern.permute.xlu0 0
    %2328 = vperm.xlu0 %2327, %v2310
    %v2329 = vpop.permute.xlu0 %2328
    %2330 = vset.pattern.permute.xlu0 0
    %2331 = vperm.xlu0 %2330, %v2312
    %v2332 = vpop.permute.xlu0 %2331
    %v2333 = vlaneseq
    %v2334 = vshrl.u32 %v2333, 7
    %v2335 = vsub.s32 %v1933, %v2334
    %v2336 = vrot.slane %v2320, %v2335
    %v2337 = vlaneseq
    %v2338 = vshrl.u32 %v2337, 7
    %v2339 = vsub.s32 %v1933, %v2338
    %v2340 = vrot.slane %v2323, %v2339
    %v2341 = vlaneseq
    %v2342 = vshrl.u32 %v2341, 7
    %v2343 = vsub.s32 %v1933, %v2342
    %v2344 = vrot.slane %v2326, %v2343
    %v2345 = vlaneseq
    %v2346 = vshrl.u32 %v2345, 7
    %v2347 = vsub.s32 %v1933, %v2346
    %v2348 = vrot.slane %v2329, %v2347
    %v2349 = vlaneseq
    %v2350 = vshrl.u32 %v2349, 7
    %v2351 = vsub.s32 %v1933, %v2350
    %v2352 = vrot.slane %v2332, %v2351
    %v2353 = vsel %vm1974, %v2340, %v2336
    %v2354 = vsel %vm2177, %v2344, %v2353
    %v2355 = vsel %vm2179, %v2348, %v2354
    %v2356 = vsel %vm2181, %v2352, %v2355
    %2358 = vst.msk [vmem:[%s7] sm:$0x1f] %vm2184, %v2356
    %2359 = vst [vmem:[#allocation5] sm:$0x1f] %v599
    %2360 = vst.msk [vmem:[#allocation5 + $0x8] sm:$0x1f] %vm514, %v600
    %2361 = vst [vmem:[#allocation5 + $0x10] sm:$0x1f] %v601
    %2362 = vst.msk [vmem:[#allocation5 + $0x18] sm:$0x1f] %vm514, %v602
    %2363 = vst [vmem:[#allocation5 + $0x20] sm:$0x1f] %v603
    %2364 = vst.msk [vmem:[#allocation5 + $0x28] sm:$0x1f] %vm514, %v604
    %2365 = vst [vmem:[#allocation5 + $0x30] sm:$0x1f] %v605
    %2366 = vst.msk [vmem:[#allocation5 + $0x38] sm:$0x1f] %vm514, %v606
    %2367 = vst [vmem:[#allocation5 + $0x40] sm:$0x1f] %v607
    %2368 = vst.msk [vmem:[#allocation5 + $0x48] sm:$0x1f] %vm514, %v608
    // Predicated region
    $region34: #{tpu_custom_call.1} parent=1 // pred_check
      _
    $region35: #{tpu_custom_call.1} parent=1 // pred_check_branch
      %2370 = sbr.rel (0) target = $region37
    $region36: #{tpu_custom_call.1} parent=1 // pred_region
      _
    $region37: #{tpu_custom_call.1} parent=1 // pred_fallthru
      _
    // Predicated region
    $region38: #{tpu_custom_call.1} parent=1 // pred_check
      _
    $region39: #{tpu_custom_call.1} parent=1 // pred_check_branch
      %2372 = sbr.rel (0) target = $region41
    $region40: #{tpu_custom_call.1} parent=1 // pred_region
      %s2374 = ssub.s32 1280, 1280
      %2375 = vsyncadd [#allocation4], %s2374
      %s2376 = sshll.u32 [#allocation5], 4
      %s2377 = int_to_ptr.vmem [resolvable:$true] %s2376
      %2382 = dma.vmem_to_hbm [thread:$0]  %s2377, 1280, %s8, [#allocation4], 256, 256, 16
    $region41: #{tpu_custom_call.1} parent=1 // pred_fallthru
      _
    // Predicated region
    $region42: #{tpu_custom_call.1} parent=1 // pred_check
      _
    $region43: #{tpu_custom_call.1} parent=1 // pred_check_branch
      %2384 = sbr.rel (0) target = $region45
    $region44: #{tpu_custom_call.1} parent=1 // pred_region
      _
    $region45: #{tpu_custom_call.1} parent=1 // pred_fallthru
      _
    // Predicated region
    $region46: #{tpu_custom_call.1} parent=1 // pred_check
      _
    $region47: #{tpu_custom_call.1} parent=1 // pred_check_branch
      %2386 = sbr.rel (0) target = $region49
    $region48: #{tpu_custom_call.1} parent=1 // pred_region
      %2387 = dma.done [#allocation4], 1280
    $region49: #{tpu_custom_call.1} parent=1 // pred_fallthru
      _
    %2388 = vsyncpa [#allocation3], 1
    %2389 = vsyncpa [#allocation4], 1

</llo_original>
